<compile_context>
chip_gen: v7x
topology: tpu7x:2x2x1
jax: 0.10.0
libtpu: 0.0.40
codegen_flags: <defaults>
</compile_context>

<pallas_src>
import jax
import jax.numpy as jnp
import numpy as np
from jax.experimental import pallas as pl
from jax.experimental.pallas import tpu as pltpu


# ----------------------------------------------------------------------------
# Fused kernel: both LSTM stacks (lane-fused) + FC head, everything VMEM-resident.
# ----------------------------------------------------------------------------
def _make_fused_kernel(num_layers, T, Bp, H, apply_sigmoid):
    """Argument order (all f32):
       xt (T*Bp, Dt), xi (T*Bp, Di),
       w0t (Dt, 8H), w0i (Di, 8H), b0 (1, 8H), whh0 (2H, 8H),          # layer 0
       [w_in (2H, 8H), b (1, 8H), whh (2H, 8H)] * (num_layers - 1),     # layers 1..
       w_fc (2H, P), b_fc (1, P)
       -> out (Bp, P)
       Combined gate-column order: [i_t,i_i, f_t,f_i, o_t,o_i, g_t,g_i]."""
    H2, H6 = 2 * H, 6 * H

    def kernel(*refs):
        idx = 0
        xt_ref, xi_ref = refs[idx], refs[idx + 1]
        w0t_ref, w0i_ref, b0_ref, whh0_ref = refs[idx + 2:idx + 6]
        idx += 6
        upper = []
        for _ in range(num_layers - 1):
            upper.append((refs[idx], refs[idx + 1], refs[idx + 2]))
            idx += 3
        wfc_ref, bfc_ref, out_ref = refs[idx], refs[idx + 1], refs[idx + 2]

        def run_layer(pre, whh, keep_seq):
            """pre: (T*Bp, 8H) precomputed input projection (+bias).
               Serial recurrence over T (static unroll); both streams lane-fused."""
            h = jnp.zeros((Bp, H2), jnp.float32)
            c = jnp.zeros((Bp, H2), jnp.float32)
            hs = []
            for t in range(T):
                g = pre[t * Bp:(t + 1) * Bp, :] + jnp.dot(
                    h, whh, preferred_element_type=jnp.float32)      # (Bp, 8H)
                sig = jax.nn.sigmoid(g[:, :H6])                       # i|f|o, both streams
                gg = jnp.tanh(g[:, H6:])                              # g, both streams
                i_g = sig[:, 0 * H2:1 * H2]
                f_g = sig[:, 1 * H2:2 * H2]
                o_g = sig[:, 2 * H2:3 * H2]
                c = f_g * c + i_g * gg
                h = o_g * jnp.tanh(c)
                if keep_seq:
                    hs.append(h)
            seq = jnp.concatenate(hs, axis=0) if keep_seq else None
            return seq, h

        # Layer 0: input projection for ALL timesteps at once (off the serial path).
        pre0 = (jnp.dot(xt_ref[...], w0t_ref[...], preferred_element_type=jnp.float32)
                + jnp.dot(xi_ref[...], w0i_ref[...], preferred_element_type=jnp.float32)
                + b0_ref[...])                                        # (T*Bp, 8H)
        seq, h = run_layer(pre0, whh0_ref[...], keep_seq=(num_layers > 1))

        for li, (win_ref, b_ref, whh_ref) in enumerate(upper):
            pre = (jnp.dot(seq, win_ref[...], preferred_element_type=jnp.float32)
                   + b_ref[...])                                      # (T*Bp, 8H)
            seq, h = run_layer(pre, whh_ref[...], keep_seq=(li < num_layers - 2))

        # FC head: concat(h_text, h_ili) @ W_fc^T + b  ==  h_comb @ w_fc + b
        y = jnp.dot(h, wfc_ref[...], preferred_element_type=jnp.float32) + bfc_ref[...]
        if apply_sigmoid:
            y = jax.nn.sigmoid(y)
        out_ref[...] = y

    return kernel


def flucast_forward(text_x, ili_x, layer0, upper_layers, w_fc, b_fc,
                    apply_sigmoid, hidden_dim):
    """text_x: (B, T, Dt), ili_x: (B, T, Di), batch-first (PyTorch layout)."""
    B, T, _ = text_x.shape
    H = hidden_dim
    P = w_fc.shape[1]
    Bp = max(8, ((B + 7) // 8) * 8)       # pad batch to f32 sublane tile

    def prep(x):
        if Bp != B:
            x = jnp.pad(x, ((0, Bp - B), (0, 0), (0, 0)))
        # batch-first -> time-major, flattened: row (t*Bp + b)
        return jnp.transpose(x, (1, 0, 2)).reshape(T * Bp, x.shape[2])

    xt = prep(text_x)
    xi = prep(ili_x)

    num_layers = 1 + len(upper_layers)
    kernel = _make_fused_kernel(num_layers, T, Bp, H, apply_sigmoid)

    args = [xt, xi] + list(layer0)
    for p in upper_layers:
        args.extend(p)
    args.extend([w_fc, b_fc])

    out = pl.pallas_call(
        kernel,
        out_shape=jax.ShapeDtypeStruct((Bp, P), jnp.float32),
        compiler_params=pltpu.CompilerParams(vmem_limit_bytes=32 << 20),
    )(*args)
    return out[:B]


# ----------------------------------------------------------------------------
# Parameter construction (deterministic, PyTorch-shaped).  Gate columns of the
# two streams are interleaved into [i_t,i_i,f_t,f_i,o_t,o_i,g_t,g_i] and the
# recurrent / upper-layer input weights are made block-diagonal at build time.
# ----------------------------------------------------------------------------
def _split_gates(w, H):
    """Split last axis (4H, PyTorch order [i, f, g, o])."""
    return w[..., 0:H], w[..., H:2 * H], w[..., 2 * H:3 * H], w[..., 3 * H:4 * H]


def _interleave_gate_cols(wt, wi, H):
    """wt/wi: (..., 4H) text / ili gate-ordered [i,f,g,o].
       Returns (..., 8H) in combined order [i_t,i_i,f_t,f_i,o_t,o_i,g_t,g_i]."""
    it, ft, gt, ot = _split_gates(wt, H)
    ii, fi, gi, oi = _split_gates(wi, H)
    return jnp.concatenate([it, ii, ft, fi, ot, oi, gt, gi], axis=-1)


def _block_diag_comb(wt_T, wi_T, H):
    """wt_T/wi_T: (D, 4H) transposed per-stack weights.  Returns (2D?, 8H) with
       text rows feeding only text gate columns and ili rows only ili columns."""
    zt = jnp.zeros_like(wt_T)
    zi = jnp.zeros_like(wi_T)
    top = _interleave_gate_cols(wt_T, jnp.zeros(wt_T.shape, jnp.float32), H)
    bot = _interleave_gate_cols(jnp.zeros(wi_T.shape, jnp.float32), wi_T, H)
    del zt, zi
    return jnp.concatenate([top, bot], axis=0)


def _raw_lstm_params(key, input_size, hidden_dim, num_layers, scale=0.1):
    """PyTorch-layout raw parameters: (W_ih (4H,Din), W_hh (4H,H), b_ih, b_hh)."""
    params = []
    H = hidden_dim
    for layer in range(num_layers):
        d_in = input_size if layer == 0 else hidden_dim
        key, k1, k2, k3, k4 = jax.random.split(key, 5)
        w_ih = scale * jax.random.normal(k1, (4 * H, d_in), jnp.float32)
        w_hh = scale * jax.random.normal(k2, (4 * H, H), jnp.float32)
        b_ih = scale * jax.random.normal(k3, (4 * H,), jnp.float32)
        b_hh = scale * jax.random.normal(k4, (4 * H,), jnp.float32)
        params.append((w_ih, w_hh, b_ih, b_hh))
    return params, key


class FluCastTextV1Pallas:
    def __init__(self, pred_type, text_input_size, num_layers, hidden_dim,
                 numeric_multi_var_flag, news_flag, abstract_flag, patent_flag,
                 pred_len=1):
        self.pred_type = pred_type
        self.news_flag = news_flag
        self.abstract_flag = abstract_flag
        self.patent_flag = patent_flag
        self.hidden_dim = hidden_dim
        self.num_layers = num_layers
        self.ili_input_size = 5 if numeric_multi_var_flag else 1
        self.pred_len = pred_len if pred_type == "pred" else 1
        num_text = int(news_flag) + int(abstract_flag) + int(patent_flag)
        total_text = text_input_size * num_text
        H = hidden_dim

        key = jax.random.PRNGKey(42)
        self._text_raw, key = _raw_lstm_params(key, total_text, H, num_layers)
        self._ili_raw, key = _raw_lstm_params(key, self.ili_input_size, H, num_layers)
        key, k1, k2 = jax.random.split(key, 3)
        self._w_fc_raw = 0.1 * jax.random.normal(k1, (self.pred_len, 2 * H), jnp.float32)
        self._b_fc_raw = 0.1 * jax.random.normal(k2, (self.pred_len,), jnp.float32)

        # --- build fused / combined kernel parameters (once) ---
        w_ih_t, w_hh_t, b_ih_t, b_hh_t = self._text_raw[0]
        w_ih_i, w_hh_i, b_ih_i, b_hh_i = self._ili_raw[0]
        Dt, Di = w_ih_t.shape[1], w_ih_i.shape[1]
        w0t = _interleave_gate_cols(w_ih_t.T, jnp.zeros((Dt, 4 * H), jnp.float32), H)
        w0i = _interleave_gate_cols(jnp.zeros((Di, 4 * H), jnp.float32), w_ih_i.T, H)
        b0 = _interleave_gate_cols((b_ih_t + b_hh_t).reshape(1, -1),
                                   (b_ih_i + b_hh_i).reshape(1, -1), H)
        whh0 = _block_diag_comb(w_hh_t.T, w_hh_i.T, H)                 # (2H, 8H)
        self.layer0 = (w0t, w0i, b0, whh0)

        self.upper_layers = []
        for l in range(1, num_layers):
            w_ih_t, w_hh_t, b_ih_t, b_hh_t = self._text_raw[l]
            w_ih_i, w_hh_i, b_ih_i, b_hh_i = self._ili_raw[l]
            w_in = _block_diag_comb(w_ih_t.T, w_ih_i.T, H)             # (2H, 8H)
            b = _interleave_gate_cols((b_ih_t + b_hh_t).reshape(1, -1),
                                      (b_ih_i + b_hh_i).reshape(1, -1), H)
            whh = _block_diag_comb(w_hh_t.T, w_hh_i.T, H)              # (2H, 8H)
            self.upper_layers.append((w_in, b, whh))

        self.w_fc = self._w_fc_raw.T                                   # (2H, P)
        self.b_fc = self._b_fc_raw.reshape(1, -1)                      # (1, P)

    def _gather_inputs(self, inputs):
        idx = 0
        text_embeddings = []
        if self.news_flag:
            text_embeddings.append(inputs[idx]); idx += 1
        if self.abstract_flag:
            text_embeddings.append(inputs[idx]); idx += 1
        if self.patent_flag:
            text_embeddings.append(inputs[idx]); idx += 1
        text_input = (jnp.concatenate(text_embeddings, axis=2)
                      if len(text_embeddings) > 1 else text_embeddings[0])
        ili_input = inputs[idx]
        return text_input, ili_input

    def __call__(self, *inputs):
        text_input, ili_input = self._gather_inputs(inputs)
        return flucast_forward(
            text_input, ili_input,
            self.layer0, self.upper_layers,
            self.w_fc, self.b_fc,
            apply_sigmoid=(self.pred_type == "cls"),
            hidden_dim=self.hidden_dim)

    # Pure-JAX reference (mirrors the PyTorch module) for a silent sanity check.
    def reference(self, *inputs):
        text_input, ili_input = self._gather_inputs(inputs)
        H = self.hidden_dim

        def run_stack(x, raw):
            B, T, _ = x.shape
            seq = x
            h = jnp.zeros((B, H), jnp.float32)
            for (w_ih, w_hh, b_ih, b_hh) in raw:
                h = jnp.zeros((B, H), jnp.float32)
                c = jnp.zeros((B, H), jnp.float32)
                outs = []
                for t in range(T):
                    g = seq[:, t] @ w_ih.T + b_ih + h @ w_hh.T + b_hh
                    i = jax.nn.sigmoid(g[:, :H])
                    f = jax.nn.sigmoid(g[:, H:2 * H])
                    gg = jnp.tanh(g[:, 2 * H:3 * H])
                    o = jax.nn.sigmoid(g[:, 3 * H:])
                    c = f * c + i * gg
                    h = o * jnp.tanh(c)
                    outs.append(h)
                seq = jnp.stack(outs, axis=1)
            return h

        hn_text = run_stack(text_input, self._text_raw)
        hn_ili = run_stack(ili_input, self._ili_raw)
        y = jnp.concatenate([hn_text, hn_ili], axis=1) @ self._w_fc_raw.T + self._b_fc_raw
        if self.pred_type == "cls":
            y = jax.nn.sigmoid(y)
        return y


if __name__ == "__main__":
    B, T = 2, 8
    text_input_size = 16
    hidden_dim = 32
    num_layers = 2

    model = FluCastTextV1Pallas(
        pred_type="cls",
        text_input_size=text_input_size,
        num_layers=num_layers,
        hidden_dim=hidden_dim,
        numeric_multi_var_flag=True,   # ili_input_size = 5
        news_flag=True,
        abstract_flag=True,
        patent_flag=True,
        pred_len=1,
    )

    key = jax.random.PRNGKey(0)
    k_news, k_abs, k_pat, k_ili = jax.random.split(key, 4)
    news = jax.random.normal(k_news, (B, T, text_input_size), jnp.float32)
    abstract = jax.random.normal(k_abs, (B, T, text_input_size), jnp.float32)
    patent = jax.random.normal(k_pat, (B, T, text_input_size), jnp.float32)
    ili = jax.random.normal(k_ili, (B, T, 5), jnp.float32)

    out = model(news, abstract, patent, ili)
    jax.block_until_ready(out)
    assert out.shape == (B, 1)

    ref = model.reference(news, abstract, patent, ili)
    jax.block_until_ready(ref)
    np.testing.assert_allclose(np.asarray(out), np.asarray(ref), atol=2e-3, rtol=2e-3)

    print("KERNEL_OK")
</pallas_src>

<mosaic_0001>
module attributes {stable_mosaic.version = 11 : i64} {
  func.func @kernel(%arg0: memref<64x48xf32, #tpu.memory_space<vmem>>, %arg1: memref<64x5xf32, #tpu.memory_space<vmem>>, %arg2: memref<48x256xf32, #tpu.memory_space<vmem>>, %arg3: memref<5x256xf32, #tpu.memory_space<vmem>>, %arg4: memref<1x256xf32, #tpu.memory_space<vmem>>, %arg5: memref<64x256xf32, #tpu.memory_space<vmem>>, %arg6: memref<64x256xf32, #tpu.memory_space<vmem>>, %arg7: memref<1x256xf32, #tpu.memory_space<vmem>>, %arg8: memref<64x256xf32, #tpu.memory_space<vmem>>, %arg9: memref<64x1xf32, #tpu.memory_space<vmem>>, %arg10: memref<1x1xf32, #tpu.memory_space<vmem>>, %arg11: memref<8x1xf32, #tpu.memory_space<vmem>>) attributes {dimension_semantics = [], scalar_prefetch = 0 : i64, scratch_operands = 0 : i64, tpu.core_type = #tpu.core_type<tc>} {
    %c0 = arith.constant 0 : index
    %c0_0 = arith.constant 0 : index
    %0 = vector.load %arg0[%c0, %c0_0] : memref<64x48xf32, #tpu.memory_space<vmem>>, vector<64x48xf32>
    %c0_1 = arith.constant 0 : index
    %c0_2 = arith.constant 0 : index
    %1 = vector.load %arg2[%c0_1, %c0_2] : memref<48x256xf32, #tpu.memory_space<vmem>>, vector<48x256xf32>
    %cst = arith.constant dense<0.000000e+00> : vector<64x256xf32>
    %2 = tpu.matmul %0, %1, %cst {dimension_numbers = #tpu.dot_dimension_numbers<[1], [0], [0], [1], [0, 0, 1, 1], [], []>} : vector<64x48xf32>, vector<48x256xf32>, vector<64x256xf32> -> vector<64x256xf32>
    %c0_3 = arith.constant 0 : index
    %c0_4 = arith.constant 0 : index
    %3 = vector.load %arg1[%c0_3, %c0_4] : memref<64x5xf32, #tpu.memory_space<vmem>>, vector<64x5xf32>
    %c0_5 = arith.constant 0 : index
    %c0_6 = arith.constant 0 : index
    %4 = vector.load %arg3[%c0_5, %c0_6] : memref<5x256xf32, #tpu.memory_space<vmem>>, vector<5x256xf32>
    %cst_7 = arith.constant dense<0.000000e+00> : vector<64x256xf32>
    %5 = tpu.matmul %3, %4, %cst_7 {dimension_numbers = #tpu.dot_dimension_numbers<[1], [0], [0], [1], [0, 0, 1, 1], [], []>} : vector<64x5xf32>, vector<5x256xf32>, vector<64x256xf32> -> vector<64x256xf32>
    %6 = arith.addf %2, %5 : vector<64x256xf32>
    %c0_8 = arith.constant 0 : index
    %c0_9 = arith.constant 0 : index
    %7 = vector.load %arg4[%c0_8, %c0_9] : memref<1x256xf32, #tpu.memory_space<vmem>>, vector<1x256xf32>
    %8 = vector.broadcast %7 : vector<1x256xf32> to vector<64x256xf32>
    %9 = arith.addf %6, %8 : vector<64x256xf32>
    %c0_10 = arith.constant 0 : index
    %c0_11 = arith.constant 0 : index
    %10 = vector.load %arg5[%c0_10, %c0_11] : memref<64x256xf32, #tpu.memory_space<vmem>>, vector<64x256xf32>
    %cst_12 = arith.constant 0.000000e+00 : f32
    %11 = vector.broadcast %cst_12 : f32 to vector<8x64xf32>
    %cst_13 = arith.constant 0.000000e+00 : f32
    %12 = vector.broadcast %cst_13 : f32 to vector<8x64xf32>
    %13 = vector.extract_strided_slice %9 {offsets = [0, 0], sizes = [8, 256], strides = [1, 1]} : vector<64x256xf32> to vector<8x256xf32>
    %cst_14 = arith.constant dense<0.000000e+00> : vector<8x256xf32>
    %14 = tpu.matmul %11, %10, %cst_14 {dimension_numbers = #tpu.dot_dimension_numbers<[1], [0], [0], [1], [0, 0, 1, 1], [], []>} : vector<8x64xf32>, vector<64x256xf32>, vector<8x256xf32> -> vector<8x256xf32>
    %15 = arith.addf %13, %14 : vector<8x256xf32>
    %16 = vector.extract_strided_slice %15 {offsets = [0, 0], sizes = [8, 192], strides = [1, 1]} : vector<8x256xf32> to vector<8x192xf32>
    %17 = arith.negf %16 : vector<8x192xf32>
    %18 = math.exp %17 : vector<8x192xf32>
    %cst_15 = arith.constant 1.000000e+00 : f32
    %19 = vector.broadcast %cst_15 : f32 to vector<8x192xf32>
    %20 = arith.addf %19, %18 : vector<8x192xf32>
    %21 = arith.divf %19, %20 : vector<8x192xf32>
    %22 = vector.extract_strided_slice %15 {offsets = [0, 192], sizes = [8, 64], strides = [1, 1]} : vector<8x256xf32> to vector<8x64xf32>
    %23 = math.tanh %22 : vector<8x64xf32>
    %24 = vector.extract_strided_slice %21 {offsets = [0, 0], sizes = [8, 64], strides = [1, 1]} : vector<8x192xf32> to vector<8x64xf32>
    %25 = vector.extract_strided_slice %21 {offsets = [0, 64], sizes = [8, 64], strides = [1, 1]} : vector<8x192xf32> to vector<8x64xf32>
    %26 = vector.extract_strided_slice %21 {offsets = [0, 128], sizes = [8, 64], strides = [1, 1]} : vector<8x192xf32> to vector<8x64xf32>
    %27 = arith.mulf %25, %12 : vector<8x64xf32>
    %28 = arith.mulf %24, %23 : vector<8x64xf32>
    %29 = arith.addf %27, %28 : vector<8x64xf32>
    %30 = math.tanh %29 : vector<8x64xf32>
    %31 = arith.mulf %26, %30 : vector<8x64xf32>
    %32 = vector.extract_strided_slice %9 {offsets = [8, 0], sizes = [8, 256], strides = [1, 1]} : vector<64x256xf32> to vector<8x256xf32>
    %cst_16 = arith.constant dense<0.000000e+00> : vector<8x256xf32>
    %33 = tpu.matmul %31, %10, %cst_16 {dimension_numbers = #tpu.dot_dimension_numbers<[1], [0], [0], [1], [0, 0, 1, 1], [], []>} : vector<8x64xf32>, vector<64x256xf32>, vector<8x256xf32> -> vector<8x256xf32>
    %34 = arith.addf %32, %33 : vector<8x256xf32>
    %35 = vector.extract_strided_slice %34 {offsets = [0, 0], sizes = [8, 192], strides = [1, 1]} : vector<8x256xf32> to vector<8x192xf32>
    %36 = arith.negf %35 : vector<8x192xf32>
    %37 = math.exp %36 : vector<8x192xf32>
    %cst_17 = arith.constant 1.000000e+00 : f32
    %38 = vector.broadcast %cst_17 : f32 to vector<8x192xf32>
    %39 = arith.addf %38, %37 : vector<8x192xf32>
    %40 = arith.divf %38, %39 : vector<8x192xf32>
    %41 = vector.extract_strided_slice %34 {offsets = [0, 192], sizes = [8, 64], strides = [1, 1]} : vector<8x256xf32> to vector<8x64xf32>
    %42 = math.tanh %41 : vector<8x64xf32>
    %43 = vector.extract_strided_slice %40 {offsets = [0, 0], sizes = [8, 64], strides = [1, 1]} : vector<8x192xf32> to vector<8x64xf32>
    %44 = vector.extract_strided_slice %40 {offsets = [0, 64], sizes = [8, 64], strides = [1, 1]} : vector<8x192xf32> to vector<8x64xf32>
    %45 = vector.extract_strided_slice %40 {offsets = [0, 128], sizes = [8, 64], strides = [1, 1]} : vector<8x192xf32> to vector<8x64xf32>
    %46 = arith.mulf %44, %29 : vector<8x64xf32>
    %47 = arith.mulf %43, %42 : vector<8x64xf32>
    %48 = arith.addf %46, %47 : vector<8x64xf32>
    %49 = math.tanh %48 : vector<8x64xf32>
    %50 = arith.mulf %45, %49 : vector<8x64xf32>
    %51 = vector.extract_strided_slice %9 {offsets = [16, 0], sizes = [8, 256], strides = [1, 1]} : vector<64x256xf32> to vector<8x256xf32>
    %cst_18 = arith.constant dense<0.000000e+00> : vector<8x256xf32>
    %52 = tpu.matmul %50, %10, %cst_18 {dimension_numbers = #tpu.dot_dimension_numbers<[1], [0], [0], [1], [0, 0, 1, 1], [], []>} : vector<8x64xf32>, vector<64x256xf32>, vector<8x256xf32> -> vector<8x256xf32>
    %53 = arith.addf %51, %52 : vector<8x256xf32>
    %54 = vector.extract_strided_slice %53 {offsets = [0, 0], sizes = [8, 192], strides = [1, 1]} : vector<8x256xf32> to vector<8x192xf32>
    %55 = arith.negf %54 : vector<8x192xf32>
    %56 = math.exp %55 : vector<8x192xf32>
    %cst_19 = arith.constant 1.000000e+00 : f32
    %57 = vector.broadcast %cst_19 : f32 to vector<8x192xf32>
    %58 = arith.addf %57, %56 : vector<8x192xf32>
    %59 = arith.divf %57, %58 : vector<8x192xf32>
    %60 = vector.extract_strided_slice %53 {offsets = [0, 192], sizes = [8, 64], strides = [1, 1]} : vector<8x256xf32> to vector<8x64xf32>
    %61 = math.tanh %60 : vector<8x64xf32>
    %62 = vector.extract_strided_slice %59 {offsets = [0, 0], sizes = [8, 64], strides = [1, 1]} : vector<8x192xf32> to vector<8x64xf32>
    %63 = vector.extract_strided_slice %59 {offsets = [0, 64], sizes = [8, 64], strides = [1, 1]} : vector<8x192xf32> to vector<8x64xf32>
    %64 = vector.extract_strided_slice %59 {offsets = [0, 128], sizes = [8, 64], strides = [1, 1]} : vector<8x192xf32> to vector<8x64xf32>
    %65 = arith.mulf %63, %48 : vector<8x64xf32>
    %66 = arith.mulf %62, %61 : vector<8x64xf32>
    %67 = arith.addf %65, %66 : vector<8x64xf32>
    %68 = math.tanh %67 : vector<8x64xf32>
    %69 = arith.mulf %64, %68 : vector<8x64xf32>
    %70 = vector.extract_strided_slice %9 {offsets = [24, 0], sizes = [8, 256], strides = [1, 1]} : vector<64x256xf32> to vector<8x256xf32>
    %cst_20 = arith.constant dense<0.000000e+00> : vector<8x256xf32>
    %71 = tpu.matmul %69, %10, %cst_20 {dimension_numbers = #tpu.dot_dimension_numbers<[1], [0], [0], [1], [0, 0, 1, 1], [], []>} : vector<8x64xf32>, vector<64x256xf32>, vector<8x256xf32> -> vector<8x256xf32>
    %72 = arith.addf %70, %71 : vector<8x256xf32>
    %73 = vector.extract_strided_slice %72 {offsets = [0, 0], sizes = [8, 192], strides = [1, 1]} : vector<8x256xf32> to vector<8x192xf32>
    %74 = arith.negf %73 : vector<8x192xf32>
    %75 = math.exp %74 : vector<8x192xf32>
    %cst_21 = arith.constant 1.000000e+00 : f32
    %76 = vector.broadcast %cst_21 : f32 to vector<8x192xf32>
    %77 = arith.addf %76, %75 : vector<8x192xf32>
    %78 = arith.divf %76, %77 : vector<8x192xf32>
    %79 = vector.extract_strided_slice %72 {offsets = [0, 192], sizes = [8, 64], strides = [1, 1]} : vector<8x256xf32> to vector<8x64xf32>
    %80 = math.tanh %79 : vector<8x64xf32>
    %81 = vector.extract_strided_slice %78 {offsets = [0, 0], sizes = [8, 64], strides = [1, 1]} : vector<8x192xf32> to vector<8x64xf32>
    %82 = vector.extract_strided_slice %78 {offsets = [0, 64], sizes = [8, 64], strides = [1, 1]} : vector<8x192xf32> to vector<8x64xf32>
    %83 = vector.extract_strided_slice %78 {offsets = [0, 128], sizes = [8, 64], strides = [1, 1]} : vector<8x192xf32> to vector<8x64xf32>
    %84 = arith.mulf %82, %67 : vector<8x64xf32>
    %85 = arith.mulf %81, %80 : vector<8x64xf32>
    %86 = arith.addf %84, %85 : vector<8x64xf32>
    %87 = math.tanh %86 : vector<8x64xf32>
    %88 = arith.mulf %83, %87 : vector<8x64xf32>
    %89 = vector.extract_strided_slice %9 {offsets = [32, 0], sizes = [8, 256], strides = [1, 1]} : vector<64x256xf32> to vector<8x256xf32>
    %cst_22 = arith.constant dense<0.000000e+00> : vector<8x256xf32>
    %90 = tpu.matmul %88, %10, %cst_22 {dimension_numbers = #tpu.dot_dimension_numbers<[1], [0], [0], [1], [0, 0, 1, 1], [], []>} : vector<8x64xf32>, vector<64x256xf32>, vector<8x256xf32> -> vector<8x256xf32>
    %91 = arith.addf %89, %90 : vector<8x256xf32>
    %92 = vector.extract_strided_slice %91 {offsets = [0, 0], sizes = [8, 192], strides = [1, 1]} : vector<8x256xf32> to vector<8x192xf32>
    %93 = arith.negf %92 : vector<8x192xf32>
    %94 = math.exp %93 : vector<8x192xf32>
    %cst_23 = arith.constant 1.000000e+00 : f32
    %95 = vector.broadcast %cst_23 : f32 to vector<8x192xf32>
    %96 = arith.addf %95, %94 : vector<8x192xf32>
    %97 = arith.divf %95, %96 : vector<8x192xf32>
    %98 = vector.extract_strided_slice %91 {offsets = [0, 192], sizes = [8, 64], strides = [1, 1]} : vector<8x256xf32> to vector<8x64xf32>
    %99 = math.tanh %98 : vector<8x64xf32>
    %100 = vector.extract_strided_slice %97 {offsets = [0, 0], sizes = [8, 64], strides = [1, 1]} : vector<8x192xf32> to vector<8x64xf32>
    %101 = vector.extract_strided_slice %97 {offsets = [0, 64], sizes = [8, 64], strides = [1, 1]} : vector<8x192xf32> to vector<8x64xf32>
    %102 = vector.extract_strided_slice %97 {offsets = [0, 128], sizes = [8, 64], strides = [1, 1]} : vector<8x192xf32> to vector<8x64xf32>
    %103 = arith.mulf %101, %86 : vector<8x64xf32>
    %104 = arith.mulf %100, %99 : vector<8x64xf32>
    %105 = arith.addf %103, %104 : vector<8x64xf32>
    %106 = math.tanh %105 : vector<8x64xf32>
    %107 = arith.mulf %102, %106 : vector<8x64xf32>
    %108 = vector.extract_strided_slice %9 {offsets = [40, 0], sizes = [8, 256], strides = [1, 1]} : vector<64x256xf32> to vector<8x256xf32>
    %cst_24 = arith.constant dense<0.000000e+00> : vector<8x256xf32>
    %109 = tpu.matmul %107, %10, %cst_24 {dimension_numbers = #tpu.dot_dimension_numbers<[1], [0], [0], [1], [0, 0, 1, 1], [], []>} : vector<8x64xf32>, vector<64x256xf32>, vector<8x256xf32> -> vector<8x256xf32>
    %110 = arith.addf %108, %109 : vector<8x256xf32>
    %111 = vector.extract_strided_slice %110 {offsets = [0, 0], sizes = [8, 192], strides = [1, 1]} : vector<8x256xf32> to vector<8x192xf32>
    %112 = arith.negf %111 : vector<8x192xf32>
    %113 = math.exp %112 : vector<8x192xf32>
    %cst_25 = arith.constant 1.000000e+00 : f32
    %114 = vector.broadcast %cst_25 : f32 to vector<8x192xf32>
    %115 = arith.addf %114, %113 : vector<8x192xf32>
    %116 = arith.divf %114, %115 : vector<8x192xf32>
    %117 = vector.extract_strided_slice %110 {offsets = [0, 192], sizes = [8, 64], strides = [1, 1]} : vector<8x256xf32> to vector<8x64xf32>
    %118 = math.tanh %117 : vector<8x64xf32>
    %119 = vector.extract_strided_slice %116 {offsets = [0, 0], sizes = [8, 64], strides = [1, 1]} : vector<8x192xf32> to vector<8x64xf32>
    %120 = vector.extract_strided_slice %116 {offsets = [0, 64], sizes = [8, 64], strides = [1, 1]} : vector<8x192xf32> to vector<8x64xf32>
    %121 = vector.extract_strided_slice %116 {offsets = [0, 128], sizes = [8, 64], strides = [1, 1]} : vector<8x192xf32> to vector<8x64xf32>
    %122 = arith.mulf %120, %105 : vector<8x64xf32>
    %123 = arith.mulf %119, %118 : vector<8x64xf32>
    %124 = arith.addf %122, %123 : vector<8x64xf32>
    %125 = math.tanh %124 : vector<8x64xf32>
    %126 = arith.mulf %121, %125 : vector<8x64xf32>
    %127 = vector.extract_strided_slice %9 {offsets = [48, 0], sizes = [8, 256], strides = [1, 1]} : vector<64x256xf32> to vector<8x256xf32>
    %cst_26 = arith.constant dense<0.000000e+00> : vector<8x256xf32>
    %128 = tpu.matmul %126, %10, %cst_26 {dimension_numbers = #tpu.dot_dimension_numbers<[1], [0], [0], [1], [0, 0, 1, 1], [], []>} : vector<8x64xf32>, vector<64x256xf32>, vector<8x256xf32> -> vector<8x256xf32>
    %129 = arith.addf %127, %128 : vector<8x256xf32>
    %130 = vector.extract_strided_slice %129 {offsets = [0, 0], sizes = [8, 192], strides = [1, 1]} : vector<8x256xf32> to vector<8x192xf32>
    %131 = arith.negf %130 : vector<8x192xf32>
    %132 = math.exp %131 : vector<8x192xf32>
    %cst_27 = arith.constant 1.000000e+00 : f32
    %133 = vector.broadcast %cst_27 : f32 to vector<8x192xf32>
    %134 = arith.addf %133, %132 : vector<8x192xf32>
    %135 = arith.divf %133, %134 : vector<8x192xf32>
    %136 = vector.extract_strided_slice %129 {offsets = [0, 192], sizes = [8, 64], strides = [1, 1]} : vector<8x256xf32> to vector<8x64xf32>
    %137 = math.tanh %136 : vector<8x64xf32>
    %138 = vector.extract_strided_slice %135 {offsets = [0, 0], sizes = [8, 64], strides = [1, 1]} : vector<8x192xf32> to vector<8x64xf32>
    %139 = vector.extract_strided_slice %135 {offsets = [0, 64], sizes = [8, 64], strides = [1, 1]} : vector<8x192xf32> to vector<8x64xf32>
    %140 = vector.extract_strided_slice %135 {offsets = [0, 128], sizes = [8, 64], strides = [1, 1]} : vector<8x192xf32> to vector<8x64xf32>
    %141 = arith.mulf %139, %124 : vector<8x64xf32>
    %142 = arith.mulf %138, %137 : vector<8x64xf32>
    %143 = arith.addf %141, %142 : vector<8x64xf32>
    %144 = math.tanh %143 : vector<8x64xf32>
    %145 = arith.mulf %140, %144 : vector<8x64xf32>
    %146 = vector.extract_strided_slice %9 {offsets = [56, 0], sizes = [8, 256], strides = [1, 1]} : vector<64x256xf32> to vector<8x256xf32>
    %cst_28 = arith.constant dense<0.000000e+00> : vector<8x256xf32>
    %147 = tpu.matmul %145, %10, %cst_28 {dimension_numbers = #tpu.dot_dimension_numbers<[1], [0], [0], [1], [0, 0, 1, 1], [], []>} : vector<8x64xf32>, vector<64x256xf32>, vector<8x256xf32> -> vector<8x256xf32>
    %148 = arith.addf %146, %147 : vector<8x256xf32>
    %149 = vector.extract_strided_slice %148 {offsets = [0, 0], sizes = [8, 192], strides = [1, 1]} : vector<8x256xf32> to vector<8x192xf32>
    %150 = arith.negf %149 : vector<8x192xf32>
    %151 = math.exp %150 : vector<8x192xf32>
    %cst_29 = arith.constant 1.000000e+00 : f32
    %152 = vector.broadcast %cst_29 : f32 to vector<8x192xf32>
    %153 = arith.addf %152, %151 : vector<8x192xf32>
    %154 = arith.divf %152, %153 : vector<8x192xf32>
    %155 = vector.extract_strided_slice %148 {offsets = [0, 192], sizes = [8, 64], strides = [1, 1]} : vector<8x256xf32> to vector<8x64xf32>
    %156 = math.tanh %155 : vector<8x64xf32>
    %157 = vector.extract_strided_slice %154 {offsets = [0, 0], sizes = [8, 64], strides = [1, 1]} : vector<8x192xf32> to vector<8x64xf32>
    %158 = vector.extract_strided_slice %154 {offsets = [0, 64], sizes = [8, 64], strides = [1, 1]} : vector<8x192xf32> to vector<8x64xf32>
    %159 = vector.extract_strided_slice %154 {offsets = [0, 128], sizes = [8, 64], strides = [1, 1]} : vector<8x192xf32> to vector<8x64xf32>
    %160 = arith.mulf %158, %143 : vector<8x64xf32>
    %161 = arith.mulf %157, %156 : vector<8x64xf32>
    %162 = arith.addf %160, %161 : vector<8x64xf32>
    %163 = math.tanh %162 : vector<8x64xf32>
    %164 = arith.mulf %159, %163 : vector<8x64xf32>
    %165 = tpu.concatenate %31, %50, %69, %88, %107, %126, %145, %164 in 0 : vector<8x64xf32>, vector<8x64xf32>, vector<8x64xf32>, vector<8x64xf32>, vector<8x64xf32>, vector<8x64xf32>, vector<8x64xf32>, vector<8x64xf32> -> vector<64x64xf32>
    %c0_30 = arith.constant 0 : index
    %c0_31 = arith.constant 0 : index
    %166 = vector.load %arg6[%c0_30, %c0_31] : memref<64x256xf32, #tpu.memory_space<vmem>>, vector<64x256xf32>
    %cst_32 = arith.constant dense<0.000000e+00> : vector<64x256xf32>
    %167 = tpu.matmul %165, %166, %cst_32 {dimension_numbers = #tpu.dot_dimension_numbers<[1], [0], [0], [1], [0, 0, 1, 1], [], []>} : vector<64x64xf32>, vector<64x256xf32>, vector<64x256xf32> -> vector<64x256xf32>
    %c0_33 = arith.constant 0 : index
    %c0_34 = arith.constant 0 : index
    %168 = vector.load %arg7[%c0_33, %c0_34] : memref<1x256xf32, #tpu.memory_space<vmem>>, vector<1x256xf32>
    %169 = vector.broadcast %168 : vector<1x256xf32> to vector<64x256xf32>
    %170 = arith.addf %167, %169 : vector<64x256xf32>
    %c0_35 = arith.constant 0 : index
    %c0_36 = arith.constant 0 : index
    %171 = vector.load %arg8[%c0_35, %c0_36] : memref<64x256xf32, #tpu.memory_space<vmem>>, vector<64x256xf32>
    %cst_37 = arith.constant 0.000000e+00 : f32
    %172 = vector.broadcast %cst_37 : f32 to vector<8x64xf32>
    %cst_38 = arith.constant 0.000000e+00 : f32
    %173 = vector.broadcast %cst_38 : f32 to vector<8x64xf32>
    %174 = vector.extract_strided_slice %170 {offsets = [0, 0], sizes = [8, 256], strides = [1, 1]} : vector<64x256xf32> to vector<8x256xf32>
    %cst_39 = arith.constant dense<0.000000e+00> : vector<8x256xf32>
    %175 = tpu.matmul %172, %171, %cst_39 {dimension_numbers = #tpu.dot_dimension_numbers<[1], [0], [0], [1], [0, 0, 1, 1], [], []>} : vector<8x64xf32>, vector<64x256xf32>, vector<8x256xf32> -> vector<8x256xf32>
    %176 = arith.addf %174, %175 : vector<8x256xf32>
    %177 = vector.extract_strided_slice %176 {offsets = [0, 0], sizes = [8, 192], strides = [1, 1]} : vector<8x256xf32> to vector<8x192xf32>
    %178 = arith.negf %177 : vector<8x192xf32>
    %179 = math.exp %178 : vector<8x192xf32>
    %cst_40 = arith.constant 1.000000e+00 : f32
    %180 = vector.broadcast %cst_40 : f32 to vector<8x192xf32>
    %181 = arith.addf %180, %179 : vector<8x192xf32>
    %182 = arith.divf %180, %181 : vector<8x192xf32>
    %183 = vector.extract_strided_slice %176 {offsets = [0, 192], sizes = [8, 64], strides = [1, 1]} : vector<8x256xf32> to vector<8x64xf32>
    %184 = math.tanh %183 : vector<8x64xf32>
    %185 = vector.extract_strided_slice %182 {offsets = [0, 0], sizes = [8, 64], strides = [1, 1]} : vector<8x192xf32> to vector<8x64xf32>
    %186 = vector.extract_strided_slice %182 {offsets = [0, 64], sizes = [8, 64], strides = [1, 1]} : vector<8x192xf32> to vector<8x64xf32>
    %187 = vector.extract_strided_slice %182 {offsets = [0, 128], sizes = [8, 64], strides = [1, 1]} : vector<8x192xf32> to vector<8x64xf32>
    %188 = arith.mulf %186, %173 : vector<8x64xf32>
    %189 = arith.mulf %185, %184 : vector<8x64xf32>
    %190 = arith.addf %188, %189 : vector<8x64xf32>
    %191 = math.tanh %190 : vector<8x64xf32>
    %192 = arith.mulf %187, %191 : vector<8x64xf32>
    %193 = vector.extract_strided_slice %170 {offsets = [8, 0], sizes = [8, 256], strides = [1, 1]} : vector<64x256xf32> to vector<8x256xf32>
    %cst_41 = arith.constant dense<0.000000e+00> : vector<8x256xf32>
    %194 = tpu.matmul %192, %171, %cst_41 {dimension_numbers = #tpu.dot_dimension_numbers<[1], [0], [0], [1], [0, 0, 1, 1], [], []>} : vector<8x64xf32>, vector<64x256xf32>, vector<8x256xf32> -> vector<8x256xf32>
    %195 = arith.addf %193, %194 : vector<8x256xf32>
    %196 = vector.extract_strided_slice %195 {offsets = [0, 0], sizes = [8, 192], strides = [1, 1]} : vector<8x256xf32> to vector<8x192xf32>
    %197 = arith.negf %196 : vector<8x192xf32>
    %198 = math.exp %197 : vector<8x192xf32>
    %cst_42 = arith.constant 1.000000e+00 : f32
    %199 = vector.broadcast %cst_42 : f32 to vector<8x192xf32>
    %200 = arith.addf %199, %198 : vector<8x192xf32>
    %201 = arith.divf %199, %200 : vector<8x192xf32>
    %202 = vector.extract_strided_slice %195 {offsets = [0, 192], sizes = [8, 64], strides = [1, 1]} : vector<8x256xf32> to vector<8x64xf32>
    %203 = math.tanh %202 : vector<8x64xf32>
    %204 = vector.extract_strided_slice %201 {offsets = [0, 0], sizes = [8, 64], strides = [1, 1]} : vector<8x192xf32> to vector<8x64xf32>
    %205 = vector.extract_strided_slice %201 {offsets = [0, 64], sizes = [8, 64], strides = [1, 1]} : vector<8x192xf32> to vector<8x64xf32>
    %206 = vector.extract_strided_slice %201 {offsets = [0, 128], sizes = [8, 64], strides = [1, 1]} : vector<8x192xf32> to vector<8x64xf32>
    %207 = arith.mulf %205, %190 : vector<8x64xf32>
    %208 = arith.mulf %204, %203 : vector<8x64xf32>
    %209 = arith.addf %207, %208 : vector<8x64xf32>
    %210 = math.tanh %209 : vector<8x64xf32>
    %211 = arith.mulf %206, %210 : vector<8x64xf32>
    %212 = vector.extract_strided_slice %170 {offsets = [16, 0], sizes = [8, 256], strides = [1, 1]} : vector<64x256xf32> to vector<8x256xf32>
    %cst_43 = arith.constant dense<0.000000e+00> : vector<8x256xf32>
    %213 = tpu.matmul %211, %171, %cst_43 {dimension_numbers = #tpu.dot_dimension_numbers<[1], [0], [0], [1], [0, 0, 1, 1], [], []>} : vector<8x64xf32>, vector<64x256xf32>, vector<8x256xf32> -> vector<8x256xf32>
    %214 = arith.addf %212, %213 : vector<8x256xf32>
    %215 = vector.extract_strided_slice %214 {offsets = [0, 0], sizes = [8, 192], strides = [1, 1]} : vector<8x256xf32> to vector<8x192xf32>
    %216 = arith.negf %215 : vector<8x192xf32>
    %217 = math.exp %216 : vector<8x192xf32>
    %cst_44 = arith.constant 1.000000e+00 : f32
    %218 = vector.broadcast %cst_44 : f32 to vector<8x192xf32>
    %219 = arith.addf %218, %217 : vector<8x192xf32>
    %220 = arith.divf %218, %219 : vector<8x192xf32>
    %221 = vector.extract_strided_slice %214 {offsets = [0, 192], sizes = [8, 64], strides = [1, 1]} : vector<8x256xf32> to vector<8x64xf32>
    %222 = math.tanh %221 : vector<8x64xf32>
    %223 = vector.extract_strided_slice %220 {offsets = [0, 0], sizes = [8, 64], strides = [1, 1]} : vector<8x192xf32> to vector<8x64xf32>
    %224 = vector.extract_strided_slice %220 {offsets = [0, 64], sizes = [8, 64], strides = [1, 1]} : vector<8x192xf32> to vector<8x64xf32>
    %225 = vector.extract_strided_slice %220 {offsets = [0, 128], sizes = [8, 64], strides = [1, 1]} : vector<8x192xf32> to vector<8x64xf32>
    %226 = arith.mulf %224, %209 : vector<8x64xf32>
    %227 = arith.mulf %223, %222 : vector<8x64xf32>
    %228 = arith.addf %226, %227 : vector<8x64xf32>
    %229 = math.tanh %228 : vector<8x64xf32>
    %230 = arith.mulf %225, %229 : vector<8x64xf32>
    %231 = vector.extract_strided_slice %170 {offsets = [24, 0], sizes = [8, 256], strides = [1, 1]} : vector<64x256xf32> to vector<8x256xf32>
    %cst_45 = arith.constant dense<0.000000e+00> : vector<8x256xf32>
    %232 = tpu.matmul %230, %171, %cst_45 {dimension_numbers = #tpu.dot_dimension_numbers<[1], [0], [0], [1], [0, 0, 1, 1], [], []>} : vector<8x64xf32>, vector<64x256xf32>, vector<8x256xf32> -> vector<8x256xf32>
    %233 = arith.addf %231, %232 : vector<8x256xf32>
    %234 = vector.extract_strided_slice %233 {offsets = [0, 0], sizes = [8, 192], strides = [1, 1]} : vector<8x256xf32> to vector<8x192xf32>
    %235 = arith.negf %234 : vector<8x192xf32>
    %236 = math.exp %235 : vector<8x192xf32>
    %cst_46 = arith.constant 1.000000e+00 : f32
    %237 = vector.broadcast %cst_46 : f32 to vector<8x192xf32>
    %238 = arith.addf %237, %236 : vector<8x192xf32>
    %239 = arith.divf %237, %238 : vector<8x192xf32>
    %240 = vector.extract_strided_slice %233 {offsets = [0, 192], sizes = [8, 64], strides = [1, 1]} : vector<8x256xf32> to vector<8x64xf32>
    %241 = math.tanh %240 : vector<8x64xf32>
    %242 = vector.extract_strided_slice %239 {offsets = [0, 0], sizes = [8, 64], strides = [1, 1]} : vector<8x192xf32> to vector<8x64xf32>
    %243 = vector.extract_strided_slice %239 {offsets = [0, 64], sizes = [8, 64], strides = [1, 1]} : vector<8x192xf32> to vector<8x64xf32>
    %244 = vector.extract_strided_slice %239 {offsets = [0, 128], sizes = [8, 64], strides = [1, 1]} : vector<8x192xf32> to vector<8x64xf32>
    %245 = arith.mulf %243, %228 : vector<8x64xf32>
    %246 = arith.mulf %242, %241 : vector<8x64xf32>
    %247 = arith.addf %245, %246 : vector<8x64xf32>
    %248 = math.tanh %247 : vector<8x64xf32>
    %249 = arith.mulf %244, %248 : vector<8x64xf32>
    %250 = vector.extract_strided_slice %170 {offsets = [32, 0], sizes = [8, 256], strides = [1, 1]} : vector<64x256xf32> to vector<8x256xf32>
    %cst_47 = arith.constant dense<0.000000e+00> : vector<8x256xf32>
    %251 = tpu.matmul %249, %171, %cst_47 {dimension_numbers = #tpu.dot_dimension_numbers<[1], [0], [0], [1], [0, 0, 1, 1], [], []>} : vector<8x64xf32>, vector<64x256xf32>, vector<8x256xf32> -> vector<8x256xf32>
    %252 = arith.addf %250, %251 : vector<8x256xf32>
    %253 = vector.extract_strided_slice %252 {offsets = [0, 0], sizes = [8, 192], strides = [1, 1]} : vector<8x256xf32> to vector<8x192xf32>
    %254 = arith.negf %253 : vector<8x192xf32>
    %255 = math.exp %254 : vector<8x192xf32>
    %cst_48 = arith.constant 1.000000e+00 : f32
    %256 = vector.broadcast %cst_48 : f32 to vector<8x192xf32>
    %257 = arith.addf %256, %255 : vector<8x192xf32>
    %258 = arith.divf %256, %257 : vector<8x192xf32>
    %259 = vector.extract_strided_slice %252 {offsets = [0, 192], sizes = [8, 64], strides = [1, 1]} : vector<8x256xf32> to vector<8x64xf32>
    %260 = math.tanh %259 : vector<8x64xf32>
    %261 = vector.extract_strided_slice %258 {offsets = [0, 0], sizes = [8, 64], strides = [1, 1]} : vector<8x192xf32> to vector<8x64xf32>
    %262 = vector.extract_strided_slice %258 {offsets = [0, 64], sizes = [8, 64], strides = [1, 1]} : vector<8x192xf32> to vector<8x64xf32>
    %263 = vector.extract_strided_slice %258 {offsets = [0, 128], sizes = [8, 64], strides = [1, 1]} : vector<8x192xf32> to vector<8x64xf32>
    %264 = arith.mulf %262, %247 : vector<8x64xf32>
    %265 = arith.mulf %261, %260 : vector<8x64xf32>
    %266 = arith.addf %264, %265 : vector<8x64xf32>
    %267 = math.tanh %266 : vector<8x64xf32>
    %268 = arith.mulf %263, %267 : vector<8x64xf32>
    %269 = vector.extract_strided_slice %170 {offsets = [40, 0], sizes = [8, 256], strides = [1, 1]} : vector<64x256xf32> to vector<8x256xf32>
    %cst_49 = arith.constant dense<0.000000e+00> : vector<8x256xf32>
    %270 = tpu.matmul %268, %171, %cst_49 {dimension_numbers = #tpu.dot_dimension_numbers<[1], [0], [0], [1], [0, 0, 1, 1], [], []>} : vector<8x64xf32>, vector<64x256xf32>, vector<8x256xf32> -> vector<8x256xf32>
    %271 = arith.addf %269, %270 : vector<8x256xf32>
    %272 = vector.extract_strided_slice %271 {offsets = [0, 0], sizes = [8, 192], strides = [1, 1]} : vector<8x256xf32> to vector<8x192xf32>
    %273 = arith.negf %272 : vector<8x192xf32>
    %274 = math.exp %273 : vector<8x192xf32>
    %cst_50 = arith.constant 1.000000e+00 : f32
    %275 = vector.broadcast %cst_50 : f32 to vector<8x192xf32>
    %276 = arith.addf %275, %274 : vector<8x192xf32>
    %277 = arith.divf %275, %276 : vector<8x192xf32>
    %278 = vector.extract_strided_slice %271 {offsets = [0, 192], sizes = [8, 64], strides = [1, 1]} : vector<8x256xf32> to vector<8x64xf32>
    %279 = math.tanh %278 : vector<8x64xf32>
    %280 = vector.extract_strided_slice %277 {offsets = [0, 0], sizes = [8, 64], strides = [1, 1]} : vector<8x192xf32> to vector<8x64xf32>
    %281 = vector.extract_strided_slice %277 {offsets = [0, 64], sizes = [8, 64], strides = [1, 1]} : vector<8x192xf32> to vector<8x64xf32>
    %282 = vector.extract_strided_slice %277 {offsets = [0, 128], sizes = [8, 64], strides = [1, 1]} : vector<8x192xf32> to vector<8x64xf32>
    %283 = arith.mulf %281, %266 : vector<8x64xf32>
    %284 = arith.mulf %280, %279 : vector<8x64xf32>
    %285 = arith.addf %283, %284 : vector<8x64xf32>
    %286 = math.tanh %285 : vector<8x64xf32>
    %287 = arith.mulf %282, %286 : vector<8x64xf32>
    %288 = vector.extract_strided_slice %170 {offsets = [48, 0], sizes = [8, 256], strides = [1, 1]} : vector<64x256xf32> to vector<8x256xf32>
    %cst_51 = arith.constant dense<0.000000e+00> : vector<8x256xf32>
    %289 = tpu.matmul %287, %171, %cst_51 {dimension_numbers = #tpu.dot_dimension_numbers<[1], [0], [0], [1], [0, 0, 1, 1], [], []>} : vector<8x64xf32>, vector<64x256xf32>, vector<8x256xf32> -> vector<8x256xf32>
    %290 = arith.addf %288, %289 : vector<8x256xf32>
    %291 = vector.extract_strided_slice %290 {offsets = [0, 0], sizes = [8, 192], strides = [1, 1]} : vector<8x256xf32> to vector<8x192xf32>
    %292 = arith.negf %291 : vector<8x192xf32>
    %293 = math.exp %292 : vector<8x192xf32>
    %cst_52 = arith.constant 1.000000e+00 : f32
    %294 = vector.broadcast %cst_52 : f32 to vector<8x192xf32>
    %295 = arith.addf %294, %293 : vector<8x192xf32>
    %296 = arith.divf %294, %295 : vector<8x192xf32>
    %297 = vector.extract_strided_slice %290 {offsets = [0, 192], sizes = [8, 64], strides = [1, 1]} : vector<8x256xf32> to vector<8x64xf32>
    %298 = math.tanh %297 : vector<8x64xf32>
    %299 = vector.extract_strided_slice %296 {offsets = [0, 0], sizes = [8, 64], strides = [1, 1]} : vector<8x192xf32> to vector<8x64xf32>
    %300 = vector.extract_strided_slice %296 {offsets = [0, 64], sizes = [8, 64], strides = [1, 1]} : vector<8x192xf32> to vector<8x64xf32>
    %301 = vector.extract_strided_slice %296 {offsets = [0, 128], sizes = [8, 64], strides = [1, 1]} : vector<8x192xf32> to vector<8x64xf32>
    %302 = arith.mulf %300, %285 : vector<8x64xf32>
    %303 = arith.mulf %299, %298 : vector<8x64xf32>
    %304 = arith.addf %302, %303 : vector<8x64xf32>
    %305 = math.tanh %304 : vector<8x64xf32>
    %306 = arith.mulf %301, %305 : vector<8x64xf32>
    %307 = vector.extract_strided_slice %170 {offsets = [56, 0], sizes = [8, 256], strides = [1, 1]} : vector<64x256xf32> to vector<8x256xf32>
    %cst_53 = arith.constant dense<0.000000e+00> : vector<8x256xf32>
    %308 = tpu.matmul %306, %171, %cst_53 {dimension_numbers = #tpu.dot_dimension_numbers<[1], [0], [0], [1], [0, 0, 1, 1], [], []>} : vector<8x64xf32>, vector<64x256xf32>, vector<8x256xf32> -> vector<8x256xf32>
    %309 = arith.addf %307, %308 : vector<8x256xf32>
    %310 = vector.extract_strided_slice %309 {offsets = [0, 0], sizes = [8, 192], strides = [1, 1]} : vector<8x256xf32> to vector<8x192xf32>
    %311 = arith.negf %310 : vector<8x192xf32>
    %312 = math.exp %311 : vector<8x192xf32>
    %cst_54 = arith.constant 1.000000e+00 : f32
    %313 = vector.broadcast %cst_54 : f32 to vector<8x192xf32>
    %314 = arith.addf %313, %312 : vector<8x192xf32>
    %315 = arith.divf %313, %314 : vector<8x192xf32>
    %316 = vector.extract_strided_slice %309 {offsets = [0, 192], sizes = [8, 64], strides = [1, 1]} : vector<8x256xf32> to vector<8x64xf32>
    %317 = math.tanh %316 : vector<8x64xf32>
    %318 = vector.extract_strided_slice %315 {offsets = [0, 0], sizes = [8, 64], strides = [1, 1]} : vector<8x192xf32> to vector<8x64xf32>
    %319 = vector.extract_strided_slice %315 {offsets = [0, 64], sizes = [8, 64], strides = [1, 1]} : vector<8x192xf32> to vector<8x64xf32>
    %320 = vector.extract_strided_slice %315 {offsets = [0, 128], sizes = [8, 64], strides = [1, 1]} : vector<8x192xf32> to vector<8x64xf32>
    %321 = arith.mulf %319, %304 : vector<8x64xf32>
    %322 = arith.mulf %318, %317 : vector<8x64xf32>
    %323 = arith.addf %321, %322 : vector<8x64xf32>
    %324 = math.tanh %323 : vector<8x64xf32>
    %325 = arith.mulf %320, %324 : vector<8x64xf32>
    %c0_55 = arith.constant 0 : index
    %c0_56 = arith.constant 0 : index
    %326 = vector.load %arg9[%c0_55, %c0_56] : memref<64x1xf32, #tpu.memory_space<vmem>>, vector<64x1xf32>
    %cst_57 = arith.constant dense<0.000000e+00> : vector<8x1xf32>
    %327 = tpu.matmul %325, %326, %cst_57 {dimension_numbers = #tpu.dot_dimension_numbers<[1], [0], [0], [1], [0, 0, 1, 1], [], []>} : vector<8x64xf32>, vector<64x1xf32>, vector<8x1xf32> -> vector<8x1xf32>
    %c0_58 = arith.constant 0 : index
    %c0_59 = arith.constant 0 : index
    %328 = vector.load %arg10[%c0_58, %c0_59] : memref<1x1xf32, #tpu.memory_space<vmem>>, vector<1x1xf32>
    %329 = vector.broadcast %328 : vector<1x1xf32> to vector<8x1xf32>
    %330 = arith.addf %327, %329 : vector<8x1xf32>
    %331 = arith.negf %330 : vector<8x1xf32>
    %332 = math.exp %331 : vector<8x1xf32>
    %cst_60 = arith.constant 1.000000e+00 : f32
    %333 = vector.broadcast %cst_60 : f32 to vector<8x1xf32>
    %334 = arith.addf %333, %332 : vector<8x1xf32>
    %335 = arith.divf %333, %334 : vector<8x1xf32>
    %c0_61 = arith.constant 0 : index
    %c0_62 = arith.constant 0 : index
    %336 = vector.load %arg11[%c0_61, %c0_62] : memref<8x1xf32, #tpu.memory_space<vmem>>, vector<8x1xf32>
    tpu.vector_store %arg11[%c0_61, %c0_62], %335 {strides = array<i32>} : memref<8x1xf32, #tpu.memory_space<vmem>>, vector<8x1xf32>,
    return
  }
}

</mosaic_0001>

<llo_original>
// kernel: tpu_custom_call.1
$region0: #{tpu_custom_call.1}
  #allocation0 [shape = 'u32[]', space=smem, size = 0x4, offset = 0x4, fixed_abs, tag = 'smem constant byte address 0x4 - core index']
  #allocation1 [shape = 'u32[144,128]{1,0:T(1,128)}', space=vmem, size = 0x12000, scoped, tag = 'internal scratch']
  #allocation2 [shape = 'f32[1,1]{1,0:T(1,128)S(1)}', space=vmem, size = 0x200, scoped, tag = 'scoped memory for tpu_custom_call.1']
  %s0 = inlined_call_operand.vmem [shape: f32[64,48], index: 0, kind: input, shape index: {}]
  %s1 = inlined_call_operand.vmem [shape: f32[64,5], index: 1, kind: input, shape index: {}]
  %s2 = inlined_call_operand.hbm [shape: f32[48,256], index: 2, kind: input, shape index: {}]
  %s3 = inlined_call_operand.hbm [shape: f32[5,256], index: 3, kind: input, shape index: {}]
  %s4 = inlined_call_operand.vmem [shape: f32[1,256], index: 4, kind: input, shape index: {}]
  %s5 = inlined_call_operand.vmem [shape: f32[64,256], index: 5, kind: input, shape index: {}]
  %s6 = inlined_call_operand.vmem [shape: f32[64,256], index: 6, kind: input, shape index: {}]
  %s7 = inlined_call_operand.vmem [shape: f32[1,256], index: 7, kind: input, shape index: {}]
  %s8 = inlined_call_operand.hbm [shape: f32[64,256], index: 8, kind: input, shape index: {}]
  %s9 = inlined_call_operand.vmem [shape: f32[64,1], index: 9, kind: input, shape index: {}]
  %s10 = inlined_call_operand.<no memory space> [shape: f32[1,1], index: 10, kind: input, shape index: {}]
  %s11 = inlined_call_operand.vmem [shape: f32[8,1], index: 11, kind: output, shape index: {}]
  %s12 = sld [smem:[#allocation0]]
  $region66: #{tpu_custom_call.1} parent=0
    _
  %s14 = ssub.s32 1, %s12
  %s15 = scalar_select 0, %s14, %s12
  %v16 = vstv %s10
  %17 = vst [vmem:[#allocation2] sm:$0x1] %v16
  $region1: #{tpu_custom_call.1} parent=0
    #allocation3 [shape = 'u8[49152]{0}', space=vmem, size = 0xc000, scoped, tag = 'input window, operand 2, single buffered']
    #allocation4 [shape = 's32[1]{0}', space=sflag, size = 0x4, scoped, tag = 'scoped memory for tpu_custom_call.1']
    #allocation5 [shape = 'u8[8192]{0}', space=vmem, size = 0x2000, scoped, tag = 'input window, operand 3, single buffered']
    #allocation6 [shape = 's32[1]{0}', space=sflag, size = 0x4, scoped, tag = 'scoped memory for tpu_custom_call.1']
    #allocation7 [shape = 'u8[65536]{0}', space=vmem, size = 0x10000, scoped, tag = 'input window, operand 8, single buffered']
    %18 = vsyncpa [#allocation4], 0
    %19 = vsyncpa [#allocation6], 0
    // Predicated region
    $region2: #{tpu_custom_call.1} parent=1 // pred_check
      _
    $region3: #{tpu_custom_call.1} parent=1 // pred_check_branch
      %21 = sbr.rel (0) target = $region5
    $region4: #{tpu_custom_call.1} parent=1 // pred_region
      _
    $region5: #{tpu_custom_call.1} parent=1 // pred_fallthru
      _
    // Predicated region
    $region6: #{tpu_custom_call.1} parent=1 // pred_check
      _
    $region7: #{tpu_custom_call.1} parent=1 // pred_check_branch
      %23 = sbr.rel (0) target = $region9
    $region8: #{tpu_custom_call.1} parent=1 // pred_region
      _
    $region9: #{tpu_custom_call.1} parent=1 // pred_fallthru
      _
    // Predicated region
    $region10: #{tpu_custom_call.1} parent=1 // pred_check
      _
    $region11: #{tpu_custom_call.1} parent=1 // pred_check_branch
      %25 = sbr.rel (0) target = $region13
    $region12: #{tpu_custom_call.1} parent=1 // pred_region
      %s27 = ssub.s32 1536, 1536
      %28 = vsyncadd [#allocation4], %s27
      %s29 = sshll.u32 [#allocation3], 4
      %s30 = int_to_ptr.vmem [resolvable:$true] %s29
      %35 = dma.hbm_to_vmem [thread:$0]  %s2, 1536, %s30, [#allocation4], 256, 256, 16
    $region13: #{tpu_custom_call.1} parent=1 // pred_fallthru
      _
    // Predicated region
    $region14: #{tpu_custom_call.1} parent=1 // pred_check
      _
    $region15: #{tpu_custom_call.1} parent=1 // pred_check_branch
      %37 = sbr.rel (0) target = $region17
    $region16: #{tpu_custom_call.1} parent=1 // pred_region
      %s39 = ssub.s32 256, 256
      %40 = vsyncadd [#allocation6], %s39
      %s42 = sshll.u32 [#allocation5], 4
      %s43 = int_to_ptr.vmem [resolvable:$true] %s42
      %45 = dma.hbm_to_vmem [thread:$0]  %s3, 256, %s43, [#allocation6]
    $region17: #{tpu_custom_call.1} parent=1 // pred_fallthru
      _
    // Predicated region
    $region18: #{tpu_custom_call.1} parent=1 // pred_check
      _
    $region19: #{tpu_custom_call.1} parent=1 // pred_check_branch
      %47 = sbr.rel (0) target = $region21
    $region20: #{tpu_custom_call.1} parent=1 // pred_region
      _
    $region21: #{tpu_custom_call.1} parent=1 // pred_fallthru
      _
    // Predicated region
    $region22: #{tpu_custom_call.1} parent=1 // pred_check
      _
    $region23: #{tpu_custom_call.1} parent=1 // pred_check_branch
      %49 = sbr.rel (0) target = $region25
    $region24: #{tpu_custom_call.1} parent=1 // pred_region
      _
    $region25: #{tpu_custom_call.1} parent=1 // pred_fallthru
      _
    // Predicated region
    $region26: #{tpu_custom_call.1} parent=1 // pred_check
      _
    $region27: #{tpu_custom_call.1} parent=1 // pred_check_branch
      %51 = sbr.rel (0) target = $region29
    $region28: #{tpu_custom_call.1} parent=1 // pred_region
      _
    $region29: #{tpu_custom_call.1} parent=1 // pred_fallthru
      _
    // Predicated region
    $region30: #{tpu_custom_call.1} parent=1 // pred_check
      _
    $region31: #{tpu_custom_call.1} parent=1 // pred_check_branch
      %53 = sbr.rel (0) target = $region33
    $region32: #{tpu_custom_call.1} parent=1 // pred_region
      _
    $region33: #{tpu_custom_call.1} parent=1 // pred_fallthru
      _
    // Predicated region
    $region34: #{tpu_custom_call.1} parent=1 // pred_check
      _
    $region35: #{tpu_custom_call.1} parent=1 // pred_check_branch
      %55 = sbr.rel (0) target = $region37
    $region36: #{tpu_custom_call.1} parent=1 // pred_region
      %s57 = ssub.s32 2048, 2048
      %58 = vsyncadd [#allocation6], %s57
      %s59 = sshll.u32 [#allocation7], 4
      %s60 = int_to_ptr.vmem [resolvable:$true] %s59
      %65 = dma.hbm_to_vmem [thread:$0]  %s8, 2048, %s60, [#allocation6], 256, 256, 16
    $region37: #{tpu_custom_call.1} parent=1 // pred_fallthru
      _
    // Predicated region
    $region38: #{tpu_custom_call.1} parent=1 // pred_check
      _
    $region39: #{tpu_custom_call.1} parent=1 // pred_check_branch
      %67 = sbr.rel (0) target = $region41
    $region40: #{tpu_custom_call.1} parent=1 // pred_region
      _
    $region41: #{tpu_custom_call.1} parent=1 // pred_fallthru
      _
    // Predicated region
    $region42: #{tpu_custom_call.1} parent=1 // pred_check
      _
    $region43: #{tpu_custom_call.1} parent=1 // pred_check_branch
      %69 = sbr.rel (0) target = $region45
    $region44: #{tpu_custom_call.1} parent=1 // pred_region
      _
    $region45: #{tpu_custom_call.1} parent=1 // pred_fallthru
      _
    // Predicated region
    $region46: #{tpu_custom_call.1} parent=1 // pred_check
      _
    $region47: #{tpu_custom_call.1} parent=1 // pred_check_branch
      %71 = sbr.rel (0) target = $region49
    $region48: #{tpu_custom_call.1} parent=1 // pred_region
      %72 = dma.done [#allocation4], 1536
    $region49: #{tpu_custom_call.1} parent=1 // pred_fallthru
      _
    // Predicated region
    $region50: #{tpu_custom_call.1} parent=1 // pred_check
      _
    $region51: #{tpu_custom_call.1} parent=1 // pred_check_branch
      %74 = sbr.rel (0) target = $region53
    $region52: #{tpu_custom_call.1} parent=1 // pred_region
      %75 = dma.done [#allocation6], 256
    $region53: #{tpu_custom_call.1} parent=1 // pred_fallthru
      _
    // Predicated region
    $region54: #{tpu_custom_call.1} parent=1 // pred_check
      _
    $region55: #{tpu_custom_call.1} parent=1 // pred_check_branch
      %77 = sbr.rel (0) target = $region57
    $region56: #{tpu_custom_call.1} parent=1 // pred_region
      %78 = dma.done [#allocation6], 2048
    $region57: #{tpu_custom_call.1} parent=1 // pred_fallthru
      _
    %v79 = vld [vmem:[%s0] sm:$0xff]
    %v80 = vld [vmem:[%s0 + $0x8] sm:$0xff]
    %v81 = vld [vmem:[%s0 + $0x10] sm:$0xff]
    %v82 = vld [vmem:[%s0 + $0x18] sm:$0xff]
    %v83 = vld [vmem:[%s0 + $0x20] sm:$0xff]
    %v84 = vld [vmem:[%s0 + $0x28] sm:$0xff]
    %v85 = vld [vmem:[%s0 + $0x30] sm:$0xff]
    %v86 = vld [vmem:[%s0 + $0x38] sm:$0xff]
    %v87 = vld [vmem:[#allocation3] sm:$0xff]
    %v88 = vld [vmem:[#allocation3 + $0x8] sm:$0xff]
    %v89 = vld [vmem:[#allocation3 + $0x10] sm:$0xff]
    %v90 = vld [vmem:[#allocation3 + $0x18] sm:$0xff]
    %v91 = vld [vmem:[#allocation3 + $0x20] sm:$0xff]
    %v92 = vld [vmem:[#allocation3 + $0x28] sm:$0xff]
    %v93 = vld [vmem:[#allocation3 + $0x30] sm:$0xff]
    %v94 = vld [vmem:[#allocation3 + $0x38] sm:$0xff]
    %v95 = vld [vmem:[#allocation3 + $0x40] sm:$0xff]
    %v96 = vld [vmem:[#allocation3 + $0x48] sm:$0xff]
    %v97 = vld [vmem:[#allocation3 + $0x50] sm:$0xff]
    %v98 = vld [vmem:[#allocation3 + $0x58] sm:$0xff]
    %v99 = vld [vmem:[%s1] sm:$0xff]
    %v100 = vld [vmem:[%s1 + $0x8] sm:$0xff]
    %v101 = vld [vmem:[%s1 + $0x10] sm:$0xff]
    %v102 = vld [vmem:[%s1 + $0x18] sm:$0xff]
    %v103 = vld [vmem:[%s1 + $0x20] sm:$0xff]
    %v104 = vld [vmem:[%s1 + $0x28] sm:$0xff]
    %v105 = vld [vmem:[%s1 + $0x30] sm:$0xff]
    %v106 = vld [vmem:[%s1 + $0x38] sm:$0xff]
    %v107 = vld [vmem:[#allocation5] sm:$0x1f]
    %v108 = vld [vmem:[#allocation5 + $0x8] sm:$0x1f]
    %vm109 = vcmask 39936
    %v111 = vsel %vm109, %v99, 0
    %v114 = vsel %vm109, %v100, 0
    %v117 = vsel %vm109, %v101, 0
    %v120 = vsel %vm109, %v102, 0
    %v123 = vsel %vm109, %v103, 0
    %v126 = vsel %vm109, %v104, 0
    %v129 = vsel %vm109, %v105, 0
    %v132 = vsel %vm109, %v106, 0
    %vm134 = vcmask 1044480
    %v136 = vsel %vm134, %v107, 0
    %v139 = vsel %vm134, %v108, 0
    %141 = vmatprep.subr.mxu0 %v139
    %142 = vmatpush1.msra.mxu0 %v136
    %143 = vmatprep.subr.mxu0 0.0
    %144 = vmatpush1.msra.mxu0 0.0
    %145 = vmatprep.subr.mxu0 0.0
    %146 = vmatpush1.msra.mxu0 0.0
    %147 = vmatprep.subr.mxu0 0.0
    %148 = vmatpush1.msra.mxu0 0.0
    %149 = vmatprep.subr.mxu0 0.0
    %150 = vmatpush1.msra.mxu0 0.0
    %151 = vmatprep.subr.mxu0 0.0
    %152 = vmatpush1.msra.mxu0 0.0
    %153 = vmatprep.subr.mxu0 0.0
    %154 = vmatpush1.msra.mxu0 0.0
    %155 = vmatprep.subr.mxu0 0.0
    %156 = vmatpush1.msra.mxu0 0.0
    %157 = vmatprep.subr.mxu0 0.0
    %158 = vmatpush1.msra.mxu0 0.0
    %159 = vmatprep.subr.mxu0 0.0
    %160 = vmatpush1.msra.mxu0 0.0
    %161 = vmatprep.subr.mxu0 0.0
    %162 = vmatpush1.msra.mxu0 0.0
    %163 = vmatprep.subr.mxu0 0.0
    %164 = vmatpush1.msra.mxu0 0.0
    %165 = vmatprep.subr.mxu0 0.0
    %166 = vmatpush1.msra.mxu0 0.0
    %167 = vmatprep.subr.mxu0 0.0
    %168 = vmatpush1.msra.mxu0 0.0
    %169 = vmatprep.subr.mxu0 0.0
    %170 = vmatpush1.msra.mxu0 0.0
    %171 = vmatprep.subr.mxu0 0.0
    %172 = vmatpush1.msra.mxu0 0.0
    %173 = vmatprep.subr.mxu0 0.0
    %174 = vmatpush1.msra.mxu0 0.0
    %175 = vmatprep.subr.mxu0 0.0
    %176 = vmatpush1.msra.mxu0 0.0
    %177 = vmatprep.subr.mxu0 0.0
    %178 = vmatpush1.msra.mxu0 0.0
    %179 = vmatprep.subr.mxu0 0.0
    %180 = vmatpush1.msra.mxu0 0.0
    %181 = vmatprep.subr.mxu0 0.0
    %182 = vmatpush1.msra.mxu0 0.0
    %183 = vmatprep.subr.mxu0 0.0
    %184 = vmatpush1.msra.mxu0 0.0
    %185 = vmatprep.subr.mxu0 0.0
    %186 = vmatpush1.msra.mxu0 0.0
    %187 = vmatprep.subr.mxu0 0.0
    %188 = vmatpush1.msra.mxu0 0.0
    %189 = vmatprep.subr.mxu0 0.0
    %190 = vmatpush1.msra.mxu0 0.0
    %191 = vmatprep.subr.mxu0 0.0
    %192 = vmatpush1.msra.mxu0 0.0
    %193 = vmatprep.subr.mxu0 0.0
    %194 = vmatpush1.msra.mxu0 0.0
    %195 = vmatprep.subr.mxu0 0.0
    %196 = vmatpush1.msra.mxu0 0.0
    %197 = vmatprep.subr.mxu0 0.0
    %198 = vmatpush1.msra.mxu0 0.0
    %199 = vmatprep.subr.mxu0 0.0
    %200 = vmatpush1.msra.mxu0 0.0
    %201 = vmatprep.subr.mxu0 0.0
    %202 = vmatpush1.msra.mxu0 0.0
    %203 = vmatprep.subr.mxu0 0.0
    %204 = vmatpush1.msra.mxu0 0.0
    %205 = vmatprep.mubr.f32.mxu0 0.0
    %206 = vmatmul.mubr.f32.gmra.mrb[0].mxu0 %v111
    %v207 = vpop.f32.mrb[0].mxu0
    %v208 = vadd.f32 0.0, %v207
    %v209 = vpop.f32.mrb[0].mxu0
    %v210 = vadd.f32 0.0, %v209
    %211 = vmatprep.mubr.f32.mxu0 0.0
    %212 = vmatmul.mubr.f32.gmra.mrb[0].mxu0 %v114
    %v213 = vpop.f32.mrb[0].mxu0
    %v214 = vadd.f32 0.0, %v213
    %v215 = vpop.f32.mrb[0].mxu0
    %v216 = vadd.f32 0.0, %v215
    %217 = vmatprep.mubr.f32.mxu0 0.0
    %218 = vmatmul.mubr.f32.gmra.mrb[0].mxu0 %v117
    %v219 = vpop.f32.mrb[0].mxu0
    %v220 = vadd.f32 0.0, %v219
    %v221 = vpop.f32.mrb[0].mxu0
    %v222 = vadd.f32 0.0, %v221
    %223 = vmatprep.mubr.f32.mxu0 0.0
    %224 = vmatmul.mubr.f32.gmra.mrb[0].mxu0 %v120
    %v225 = vpop.f32.mrb[0].mxu0
    %v226 = vadd.f32 0.0, %v225
    %v227 = vpop.f32.mrb[0].mxu0
    %v228 = vadd.f32 0.0, %v227
    %229 = vmatprep.mubr.f32.mxu0 0.0
    %230 = vmatmul.mubr.f32.gmra.mrb[0].mxu0 %v123
    %v231 = vpop.f32.mrb[0].mxu0
    %v232 = vadd.f32 0.0, %v231
    %v233 = vpop.f32.mrb[0].mxu0
    %v234 = vadd.f32 0.0, %v233
    %235 = vmatprep.mubr.f32.mxu0 0.0
    %236 = vmatmul.mubr.f32.gmra.mrb[0].mxu0 %v126
    %v237 = vpop.f32.mrb[0].mxu0
    %v238 = vadd.f32 0.0, %v237
    %v239 = vpop.f32.mrb[0].mxu0
    %v240 = vadd.f32 0.0, %v239
    %241 = vmatprep.mubr.f32.mxu0 0.0
    %242 = vmatmul.mubr.f32.gmra.mrb[0].mxu0 %v129
    %v243 = vpop.f32.mrb[0].mxu0
    %v244 = vadd.f32 0.0, %v243
    %v245 = vpop.f32.mrb[0].mxu0
    %v246 = vadd.f32 0.0, %v245
    %247 = vmatprep.mubr.f32.mxu0 0.0
    %248 = vmatmul.mubr.f32.gmra.mrb[0].mxu0 %v132
    %v249 = vpop.f32.mrb[0].mxu0
    %v250 = vadd.f32 0.0, %v249
    %v251 = vpop.f32.mrb[0].mxu0
    %v252 = vadd.f32 0.0, %v251
    %253 = vdwg.mxu0
    %vm254 = vcmask 392192
    %v256 = vsel %vm254, %v79, 0
    %v259 = vsel %vm254, %v80, 0
    %v262 = vsel %vm254, %v81, 0
    %v265 = vsel %vm254, %v82, 0
    %v268 = vsel %vm254, %v83, 0
    %v271 = vsel %vm254, %v84, 0
    %v274 = vsel %vm254, %v85, 0
    %v277 = vsel %vm254, %v86, 0
    %279 = vmatprep.subr.mxu0 %v88
    %280 = vmatpush1.msra.mxu0 %v87
    %281 = vmatprep.subr.mxu0 %v90
    %282 = vmatpush1.msra.mxu0 %v89
    %283 = vmatprep.subr.mxu0 %v92
    %284 = vmatpush1.msra.mxu0 %v91
    %285 = vmatprep.subr.mxu0 %v94
    %286 = vmatpush1.msra.mxu0 %v93
    %287 = vmatprep.subr.mxu0 %v96
    %288 = vmatpush1.msra.mxu0 %v95
    %289 = vmatprep.subr.mxu0 %v98
    %290 = vmatpush1.msra.mxu0 %v97
    %291 = vmatprep.subr.mxu0 0.0
    %292 = vmatpush1.msra.mxu0 0.0
    %293 = vmatprep.subr.mxu0 0.0
    %294 = vmatpush1.msra.mxu0 0.0
    %295 = vmatprep.subr.mxu0 0.0
    %296 = vmatpush1.msra.mxu0 0.0
    %297 = vmatprep.subr.mxu0 0.0
    %298 = vmatpush1.msra.mxu0 0.0
    %299 = vmatprep.subr.mxu0 0.0
    %300 = vmatpush1.msra.mxu0 0.0
    %301 = vmatprep.subr.mxu0 0.0
    %302 = vmatpush1.msra.mxu0 0.0
    %303 = vmatprep.subr.mxu0 0.0
    %304 = vmatpush1.msra.mxu0 0.0
    %305 = vmatprep.subr.mxu0 0.0
    %306 = vmatpush1.msra.mxu0 0.0
    %307 = vmatprep.subr.mxu0 0.0
    %308 = vmatpush1.msra.mxu0 0.0
    %309 = vmatprep.subr.mxu0 0.0
    %310 = vmatpush1.msra.mxu0 0.0
    %311 = vmatprep.subr.mxu0 0.0
    %312 = vmatpush1.msra.mxu0 0.0
    %313 = vmatprep.subr.mxu0 0.0
    %314 = vmatpush1.msra.mxu0 0.0
    %315 = vmatprep.subr.mxu0 0.0
    %316 = vmatpush1.msra.mxu0 0.0
    %317 = vmatprep.subr.mxu0 0.0
    %318 = vmatpush1.msra.mxu0 0.0
    %319 = vmatprep.subr.mxu0 0.0
    %320 = vmatpush1.msra.mxu0 0.0
    %321 = vmatprep.subr.mxu0 0.0
    %322 = vmatpush1.msra.mxu0 0.0
    %323 = vmatprep.subr.mxu0 0.0
    %324 = vmatpush1.msra.mxu0 0.0
    %325 = vmatprep.subr.mxu0 0.0
    %326 = vmatpush1.msra.mxu0 0.0
    %327 = vmatprep.subr.mxu0 0.0
    %328 = vmatpush1.msra.mxu0 0.0
    %329 = vmatprep.subr.mxu0 0.0
    %330 = vmatpush1.msra.mxu0 0.0
    %331 = vmatprep.subr.mxu0 0.0
    %332 = vmatpush1.msra.mxu0 0.0
    %333 = vmatprep.subr.mxu0 0.0
    %334 = vmatpush1.msra.mxu0 0.0
    %335 = vmatprep.subr.mxu0 0.0
    %336 = vmatpush1.msra.mxu0 0.0
    %337 = vmatprep.subr.mxu0 0.0
    %338 = vmatpush1.msra.mxu0 0.0
    %339 = vmatprep.subr.mxu0 0.0
    %340 = vmatpush1.msra.mxu0 0.0
    %341 = vmatprep.subr.mxu0 0.0
    %342 = vmatpush1.msra.mxu0 0.0
    %343 = vmatprep.mubr.f32.mxu0 0.0
    %344 = vmatmul.mubr.f32.gmra.mrb[0].mxu0 %v256
    %v345 = vpop.f32.mrb[0].mxu0
    %v346 = vadd.f32 %v208, %v345
    %v347 = vpop.f32.mrb[0].mxu0
    %v348 = vadd.f32 %v210, %v347
    %349 = vmatprep.mubr.f32.mxu0 0.0
    %350 = vmatmul.mubr.f32.gmra.mrb[0].mxu0 %v259
    %v351 = vpop.f32.mrb[0].mxu0
    %v352 = vadd.f32 %v214, %v351
    %v353 = vpop.f32.mrb[0].mxu0
    %v354 = vadd.f32 %v216, %v353
    %355 = vmatprep.mubr.f32.mxu0 0.0
    %356 = vmatmul.mubr.f32.gmra.mrb[0].mxu0 %v262
    %v357 = vpop.f32.mrb[0].mxu0
    %v358 = vadd.f32 %v220, %v357
    %v359 = vpop.f32.mrb[0].mxu0
    %v360 = vadd.f32 %v222, %v359
    %361 = vmatprep.mubr.f32.mxu0 0.0
    %362 = vmatmul.mubr.f32.gmra.mrb[0].mxu0 %v265
    %v363 = vpop.f32.mrb[0].mxu0
    %v364 = vadd.f32 %v226, %v363
    %v365 = vpop.f32.mrb[0].mxu0
    %v366 = vadd.f32 %v228, %v365
    %367 = vmatprep.mubr.f32.mxu0 0.0
    %368 = vmatmul.mubr.f32.gmra.mrb[0].mxu0 %v268
    %v369 = vpop.f32.mrb[0].mxu0
    %v370 = vadd.f32 %v232, %v369
    %v371 = vpop.f32.mrb[0].mxu0
    %v372 = vadd.f32 %v234, %v371
    %373 = vmatprep.mubr.f32.mxu0 0.0
    %374 = vmatmul.mubr.f32.gmra.mrb[0].mxu0 %v271
    %v375 = vpop.f32.mrb[0].mxu0
    %v376 = vadd.f32 %v238, %v375
    %v377 = vpop.f32.mrb[0].mxu0
    %v378 = vadd.f32 %v240, %v377
    %379 = vmatprep.mubr.f32.mxu0 0.0
    %380 = vmatmul.mubr.f32.gmra.mrb[0].mxu0 %v274
    %v381 = vpop.f32.mrb[0].mxu0
    %v382 = vadd.f32 %v244, %v381
    %v383 = vpop.f32.mrb[0].mxu0
    %v384 = vadd.f32 %v246, %v383
    %385 = vmatprep.mubr.f32.mxu0 0.0
    %386 = vmatmul.mubr.f32.gmra.mrb[0].mxu0 %v277
    %v387 = vpop.f32.mrb[0].mxu0
    %v388 = vadd.f32 %v250, %v387
    %v389 = vpop.f32.mrb[0].mxu0
    %v390 = vadd.f32 %v252, %v389
    %391 = vdwg.mxu0
    %v392 = vld [vmem:[%s4] sm:$0x3]
    %v394 = vlaneseq
    %v395 = vshrl.u32 %v394, 7
    %v396 = vsub.s32 0, %v395
    %v397 = vrot.slane %v392, %v396
    %v398 = vlaneseq
    %v399 = vshrl.u32 %v398, 7
    %v400 = vsub.s32 1, %v399
    %v401 = vrot.slane %v392, %v400
    %v404 = vadd.f32 %v346, %v397
    %v405 = vadd.f32 %v348, %v401
    %v406 = vadd.f32 %v352, %v397
    %v407 = vadd.f32 %v354, %v401
    %v408 = vadd.f32 %v358, %v397
    %v409 = vadd.f32 %v360, %v401
    %v410 = vadd.f32 %v364, %v397
    %v411 = vadd.f32 %v366, %v401
    %v412 = vadd.f32 %v370, %v397
    %v413 = vadd.f32 %v372, %v401
    %v414 = vadd.f32 %v376, %v397
    %v415 = vadd.f32 %v378, %v401
    %v416 = vadd.f32 %v382, %v397
    %v417 = vadd.f32 %v384, %v401
    %v418 = vadd.f32 %v388, %v397
    %v419 = vadd.f32 %v390, %v401
    %v420 = vld [vmem:[%s5] sm:$0xff]
    %v421 = vld [vmem:[%s5 + $0x8] sm:$0xff]
    %v422 = vld [vmem:[%s5 + $0x10] sm:$0xff]
    %v423 = vld [vmem:[%s5 + $0x18] sm:$0xff]
    %v424 = vld [vmem:[%s5 + $0x20] sm:$0xff]
    %v425 = vld [vmem:[%s5 + $0x28] sm:$0xff]
    %v426 = vld [vmem:[%s5 + $0x30] sm:$0xff]
    %v427 = vld [vmem:[%s5 + $0x38] sm:$0xff]
    %v428 = vld [vmem:[%s5 + $0x40] sm:$0xff]
    %v429 = vld [vmem:[%s5 + $0x48] sm:$0xff]
    %v430 = vld [vmem:[%s5 + $0x50] sm:$0xff]
    %v431 = vld [vmem:[%s5 + $0x58] sm:$0xff]
    %v432 = vld [vmem:[%s5 + $0x60] sm:$0xff]
    %v433 = vld [vmem:[%s5 + $0x68] sm:$0xff]
    %v434 = vld [vmem:[%s5 + $0x70] sm:$0xff]
    %v435 = vld [vmem:[%s5 + $0x78] sm:$0xff]
    %vm436 = vcmask 523264
    %v438 = vsel %vm436, 0.0, 0
    %440 = vmatprep.subr.mxu0 %v421
    %441 = vmatpush1.msra.mxu0 %v420
    %442 = vmatprep.subr.mxu0 %v423
    %443 = vmatpush1.msra.mxu0 %v422
    %444 = vmatprep.subr.mxu0 %v425
    %445 = vmatpush1.msra.mxu0 %v424
    %446 = vmatprep.subr.mxu0 %v427
    %447 = vmatpush1.msra.mxu0 %v426
    %448 = vmatprep.subr.mxu0 %v429
    %449 = vmatpush1.msra.mxu0 %v428
    %450 = vmatprep.subr.mxu0 %v431
    %451 = vmatpush1.msra.mxu0 %v430
    %452 = vmatprep.subr.mxu0 %v433
    %453 = vmatpush1.msra.mxu0 %v432
    %454 = vmatprep.subr.mxu0 %v435
    %455 = vmatpush1.msra.mxu0 %v434
    %456 = vmatprep.subr.mxu0 0.0
    %457 = vmatpush1.msra.mxu0 0.0
    %458 = vmatprep.subr.mxu0 0.0
    %459 = vmatpush1.msra.mxu0 0.0
    %460 = vmatprep.subr.mxu0 0.0
    %461 = vmatpush1.msra.mxu0 0.0
    %462 = vmatprep.subr.mxu0 0.0
    %463 = vmatpush1.msra.mxu0 0.0
    %464 = vmatprep.subr.mxu0 0.0
    %465 = vmatpush1.msra.mxu0 0.0
    %466 = vmatprep.subr.mxu0 0.0
    %467 = vmatpush1.msra.mxu0 0.0
    %468 = vmatprep.subr.mxu0 0.0
    %469 = vmatpush1.msra.mxu0 0.0
    %470 = vmatprep.subr.mxu0 0.0
    %471 = vmatpush1.msra.mxu0 0.0
    %472 = vmatprep.subr.mxu0 0.0
    %473 = vmatpush1.msra.mxu0 0.0
    %474 = vmatprep.subr.mxu0 0.0
    %475 = vmatpush1.msra.mxu0 0.0
    %476 = vmatprep.subr.mxu0 0.0
    %477 = vmatpush1.msra.mxu0 0.0
    %478 = vmatprep.subr.mxu0 0.0
    %479 = vmatpush1.msra.mxu0 0.0
    %480 = vmatprep.subr.mxu0 0.0
    %481 = vmatpush1.msra.mxu0 0.0
    %482 = vmatprep.subr.mxu0 0.0
    %483 = vmatpush1.msra.mxu0 0.0
    %484 = vmatprep.subr.mxu0 0.0
    %485 = vmatpush1.msra.mxu0 0.0
    %486 = vmatprep.subr.mxu0 0.0
    %487 = vmatpush1.msra.mxu0 0.0
    %488 = vmatprep.subr.mxu0 0.0
    %489 = vmatpush1.msra.mxu0 0.0
    %490 = vmatprep.subr.mxu0 0.0
    %491 = vmatpush1.msra.mxu0 0.0
    %492 = vmatprep.subr.mxu0 0.0
    %493 = vmatpush1.msra.mxu0 0.0
    %494 = vmatprep.subr.mxu0 0.0
    %495 = vmatpush1.msra.mxu0 0.0
    %496 = vmatprep.subr.mxu0 0.0
    %497 = vmatpush1.msra.mxu0 0.0
    %498 = vmatprep.subr.mxu0 0.0
    %499 = vmatpush1.msra.mxu0 0.0
    %500 = vmatprep.subr.mxu0 0.0
    %501 = vmatpush1.msra.mxu0 0.0
    %502 = vmatprep.subr.mxu0 0.0
    %503 = vmatpush1.msra.mxu0 0.0
    %504 = vmatprep.mubr.f32.mxu0 0.0
    %505 = vmatmul.mubr.f32.gmra.mrb[0].mxu0 %v438
    %v506 = vpop.f32.mrb[0].mxu0
    %v507 = vadd.f32 0.0, %v506
    %v508 = vpop.f32.mrb[0].mxu0
    %v509 = vadd.f32 0.0, %v508
    %510 = vdwg.mxu0
    %v511 = vadd.f32 %v404, %v507
    %v512 = vadd.f32 %v405, %v509
    %v513 = vxor.u32 %v511, 2147483648
    %v514 = vxor.u32 %v512, 2147483648
    %v515 = vmul.f32 %v513, 1.442695
    %v516 = vpow.pop %v515
    %v517 = vmul.f32 %v514, 1.442695
    %v518 = vpow.pop %v517
    %v519 = vadd.f32 %v516, 1.0
    %v520 = vadd.f32 %v518, 1.0
    %v521 = vrcp.pop %v519
    %v522 = vmul.f32 1.0, %v521
    %v523 = vrcp.pop %v520
    %v524 = vmul.f32 1.0, %v523
    %v525 = vtanh.pop %v512
    %v526 = vmul.f32 %v522, 0.0
    %528 = vrot.lane.b32.xlu0 %v525, 64
    %v529 = vpop.permute.xlu0 %528
    %v531 = vmul.f32 %v522, %v529
    %533 = vrot.lane.b32.xlu0 %v531, 64
    %v534 = vpop.permute.xlu0 %533
    %v536 = vadd.f32 %v526, %v534
    %v537 = vtanh.pop %v536
    %539 = vrot.lane.b32.xlu0 %v537, 64
    %v540 = vpop.permute.xlu0 %539
    %v542 = vmul.f32 %v524, %v540
    %v544 = vsel %vm436, %v542, 0
    %546 = vmatprep.subr.mxu0 %v421
    %547 = vmatpush1.msra.mxu0 %v420
    %548 = vmatprep.subr.mxu0 %v423
    %549 = vmatpush1.msra.mxu0 %v422
    %550 = vmatprep.subr.mxu0 %v425
    %551 = vmatpush1.msra.mxu0 %v424
    %552 = vmatprep.subr.mxu0 %v427
    %553 = vmatpush1.msra.mxu0 %v426
    %554 = vmatprep.subr.mxu0 %v429
    %555 = vmatpush1.msra.mxu0 %v428
    %556 = vmatprep.subr.mxu0 %v431
    %557 = vmatpush1.msra.mxu0 %v430
    %558 = vmatprep.subr.mxu0 %v433
    %559 = vmatpush1.msra.mxu0 %v432
    %560 = vmatprep.subr.mxu0 %v435
    %561 = vmatpush1.msra.mxu0 %v434
    %562 = vmatprep.subr.mxu0 0.0
    %563 = vmatpush1.msra.mxu0 0.0
    %564 = vmatprep.subr.mxu0 0.0
    %565 = vmatpush1.msra.mxu0 0.0
    %566 = vmatprep.subr.mxu0 0.0
    %567 = vmatpush1.msra.mxu0 0.0
    %568 = vmatprep.subr.mxu0 0.0
    %569 = vmatpush1.msra.mxu0 0.0
    %570 = vmatprep.subr.mxu0 0.0
    %571 = vmatpush1.msra.mxu0 0.0
    %572 = vmatprep.subr.mxu0 0.0
    %573 = vmatpush1.msra.mxu0 0.0
    %574 = vmatprep.subr.mxu0 0.0
    %575 = vmatpush1.msra.mxu0 0.0
    %576 = vmatprep.subr.mxu0 0.0
    %577 = vmatpush1.msra.mxu0 0.0
    %578 = vmatprep.subr.mxu0 0.0
    %579 = vmatpush1.msra.mxu0 0.0
    %580 = vmatprep.subr.mxu0 0.0
    %581 = vmatpush1.msra.mxu0 0.0
    %582 = vmatprep.subr.mxu0 0.0
    %583 = vmatpush1.msra.mxu0 0.0
    %584 = vmatprep.subr.mxu0 0.0
    %585 = vmatpush1.msra.mxu0 0.0
    %586 = vmatprep.subr.mxu0 0.0
    %587 = vmatpush1.msra.mxu0 0.0
    %588 = vmatprep.subr.mxu0 0.0
    %589 = vmatpush1.msra.mxu0 0.0
    %590 = vmatprep.subr.mxu0 0.0
    %591 = vmatpush1.msra.mxu0 0.0
    %592 = vmatprep.subr.mxu0 0.0
    %593 = vmatpush1.msra.mxu0 0.0
    %594 = vmatprep.subr.mxu0 0.0
    %595 = vmatpush1.msra.mxu0 0.0
    %596 = vmatprep.subr.mxu0 0.0
    %597 = vmatpush1.msra.mxu0 0.0
    %598 = vmatprep.subr.mxu0 0.0
    %599 = vmatpush1.msra.mxu0 0.0
    %600 = vmatprep.subr.mxu0 0.0
    %601 = vmatpush1.msra.mxu0 0.0
    %602 = vmatprep.subr.mxu0 0.0
    %603 = vmatpush1.msra.mxu0 0.0
    %604 = vmatprep.subr.mxu0 0.0
    %605 = vmatpush1.msra.mxu0 0.0
    %606 = vmatprep.subr.mxu0 0.0
    %607 = vmatpush1.msra.mxu0 0.0
    %608 = vmatprep.subr.mxu0 0.0
    %609 = vmatpush1.msra.mxu0 0.0
    %610 = vmatprep.mubr.f32.mxu0 0.0
    %611 = vmatmul.mubr.f32.gmra.mrb[0].mxu0 %v544
    %v612 = vpop.f32.mrb[0].mxu0
    %v613 = vadd.f32 0.0, %v612
    %v614 = vpop.f32.mrb[0].mxu0
    %v615 = vadd.f32 0.0, %v614
    %616 = vdwg.mxu0
    %v617 = vadd.f32 %v406, %v613
    %v618 = vadd.f32 %v407, %v615
    %v619 = vxor.u32 %v617, 2147483648
    %v620 = vxor.u32 %v618, 2147483648
    %v621 = vmul.f32 %v619, 1.442695
    %v622 = vpow.pop %v621
    %v623 = vmul.f32 %v620, 1.442695
    %v624 = vpow.pop %v623
    %v625 = vadd.f32 %v622, 1.0
    %v626 = vadd.f32 %v624, 1.0
    %v627 = vrcp.pop %v625
    %v628 = vmul.f32 1.0, %v627
    %v629 = vrcp.pop %v626
    %v630 = vmul.f32 1.0, %v629
    %v631 = vtanh.pop %v618
    %v632 = vmul.f32 %v628, %v536
    %634 = vrot.lane.b32.xlu0 %v631, 64
    %v635 = vpop.permute.xlu0 %634
    %v637 = vmul.f32 %v628, %v635
    %639 = vrot.lane.b32.xlu0 %v637, 64
    %v640 = vpop.permute.xlu0 %639
    %v642 = vadd.f32 %v632, %v640
    %v643 = vtanh.pop %v642
    %645 = vrot.lane.b32.xlu0 %v643, 64
    %v646 = vpop.permute.xlu0 %645
    %v648 = vmul.f32 %v630, %v646
    %v650 = vsel %vm436, %v648, 0
    %652 = vmatprep.subr.mxu0 %v421
    %653 = vmatpush1.msra.mxu0 %v420
    %654 = vmatprep.subr.mxu0 %v423
    %655 = vmatpush1.msra.mxu0 %v422
    %656 = vmatprep.subr.mxu0 %v425
    %657 = vmatpush1.msra.mxu0 %v424
    %658 = vmatprep.subr.mxu0 %v427
    %659 = vmatpush1.msra.mxu0 %v426
    %660 = vmatprep.subr.mxu0 %v429
    %661 = vmatpush1.msra.mxu0 %v428
    %662 = vmatprep.subr.mxu0 %v431
    %663 = vmatpush1.msra.mxu0 %v430
    %664 = vmatprep.subr.mxu0 %v433
    %665 = vmatpush1.msra.mxu0 %v432
    %666 = vmatprep.subr.mxu0 %v435
    %667 = vmatpush1.msra.mxu0 %v434
    %668 = vmatprep.subr.mxu0 0.0
    %669 = vmatpush1.msra.mxu0 0.0
    %670 = vmatprep.subr.mxu0 0.0
    %671 = vmatpush1.msra.mxu0 0.0
    %672 = vmatprep.subr.mxu0 0.0
    %673 = vmatpush1.msra.mxu0 0.0
    %674 = vmatprep.subr.mxu0 0.0
    %675 = vmatpush1.msra.mxu0 0.0
    %676 = vmatprep.subr.mxu0 0.0
    %677 = vmatpush1.msra.mxu0 0.0
    %678 = vmatprep.subr.mxu0 0.0
    %679 = vmatpush1.msra.mxu0 0.0
    %680 = vmatprep.subr.mxu0 0.0
    %681 = vmatpush1.msra.mxu0 0.0
    %682 = vmatprep.subr.mxu0 0.0
    %683 = vmatpush1.msra.mxu0 0.0
    %684 = vmatprep.subr.mxu0 0.0
    %685 = vmatpush1.msra.mxu0 0.0
    %686 = vmatprep.subr.mxu0 0.0
    %687 = vmatpush1.msra.mxu0 0.0
    %688 = vmatprep.subr.mxu0 0.0
    %689 = vmatpush1.msra.mxu0 0.0
    %690 = vmatprep.subr.mxu0 0.0
    %691 = vmatpush1.msra.mxu0 0.0
    %692 = vmatprep.subr.mxu0 0.0
    %693 = vmatpush1.msra.mxu0 0.0
    %694 = vmatprep.subr.mxu0 0.0
    %695 = vmatpush1.msra.mxu0 0.0
    %696 = vmatprep.subr.mxu0 0.0
    %697 = vmatpush1.msra.mxu0 0.0
    %698 = vmatprep.subr.mxu0 0.0
    %699 = vmatpush1.msra.mxu0 0.0
    %700 = vmatprep.subr.mxu0 0.0
    %701 = vmatpush1.msra.mxu0 0.0
    %702 = vmatprep.subr.mxu0 0.0
    %703 = vmatpush1.msra.mxu0 0.0
    %704 = vmatprep.subr.mxu0 0.0
    %705 = vmatpush1.msra.mxu0 0.0
    %706 = vmatprep.subr.mxu0 0.0
    %707 = vmatpush1.msra.mxu0 0.0
    %708 = vmatprep.subr.mxu0 0.0
    %709 = vmatpush1.msra.mxu0 0.0
    %710 = vmatprep.subr.mxu0 0.0
    %711 = vmatpush1.msra.mxu0 0.0
    %712 = vmatprep.subr.mxu0 0.0
    %713 = vmatpush1.msra.mxu0 0.0
    %714 = vmatprep.subr.mxu0 0.0
    %715 = vmatpush1.msra.mxu0 0.0
    %716 = vmatprep.mubr.f32.mxu0 0.0
    %717 = vmatmul.mubr.f32.gmra.mrb[0].mxu0 %v650
    %v718 = vpop.f32.mrb[0].mxu0
    %v719 = vadd.f32 0.0, %v718
    %v720 = vpop.f32.mrb[0].mxu0
    %v721 = vadd.f32 0.0, %v720
    %722 = vdwg.mxu0
    %v723 = vadd.f32 %v408, %v719
    %v724 = vadd.f32 %v409, %v721
    %v725 = vxor.u32 %v723, 2147483648
    %v726 = vxor.u32 %v724, 2147483648
    %v727 = vmul.f32 %v725, 1.442695
    %v728 = vpow.pop %v727
    %v729 = vmul.f32 %v726, 1.442695
    %v730 = vpow.pop %v729
    %v731 = vadd.f32 %v728, 1.0
    %v732 = vadd.f32 %v730, 1.0
    %v733 = vrcp.pop %v731
    %v734 = vmul.f32 1.0, %v733
    %v735 = vrcp.pop %v732
    %v736 = vmul.f32 1.0, %v735
    %v737 = vtanh.pop %v724
    %v738 = vmul.f32 %v734, %v642
    %740 = vrot.lane.b32.xlu0 %v737, 64
    %v741 = vpop.permute.xlu0 %740
    %v743 = vmul.f32 %v734, %v741
    %745 = vrot.lane.b32.xlu0 %v743, 64
    %v746 = vpop.permute.xlu0 %745
    %v748 = vadd.f32 %v738, %v746
    %v749 = vtanh.pop %v748
    %751 = vrot.lane.b32.xlu0 %v749, 64
    %v752 = vpop.permute.xlu0 %751
    %v754 = vmul.f32 %v736, %v752
    %v756 = vsel %vm436, %v754, 0
    %758 = vmatprep.subr.mxu0 %v421
    %759 = vmatpush1.msra.mxu0 %v420
    %760 = vmatprep.subr.mxu0 %v423
    %761 = vmatpush1.msra.mxu0 %v422
    %762 = vmatprep.subr.mxu0 %v425
    %763 = vmatpush1.msra.mxu0 %v424
    %764 = vmatprep.subr.mxu0 %v427
    %765 = vmatpush1.msra.mxu0 %v426
    %766 = vmatprep.subr.mxu0 %v429
    %767 = vmatpush1.msra.mxu0 %v428
    %768 = vmatprep.subr.mxu0 %v431
    %769 = vmatpush1.msra.mxu0 %v430
    %770 = vmatprep.subr.mxu0 %v433
    %771 = vmatpush1.msra.mxu0 %v432
    %772 = vmatprep.subr.mxu0 %v435
    %773 = vmatpush1.msra.mxu0 %v434
    %774 = vmatprep.subr.mxu0 0.0
    %775 = vmatpush1.msra.mxu0 0.0
    %776 = vmatprep.subr.mxu0 0.0
    %777 = vmatpush1.msra.mxu0 0.0
    %778 = vmatprep.subr.mxu0 0.0
    %779 = vmatpush1.msra.mxu0 0.0
    %780 = vmatprep.subr.mxu0 0.0
    %781 = vmatpush1.msra.mxu0 0.0
    %782 = vmatprep.subr.mxu0 0.0
    %783 = vmatpush1.msra.mxu0 0.0
    %784 = vmatprep.subr.mxu0 0.0
    %785 = vmatpush1.msra.mxu0 0.0
    %786 = vmatprep.subr.mxu0 0.0
    %787 = vmatpush1.msra.mxu0 0.0
    %788 = vmatprep.subr.mxu0 0.0
    %789 = vmatpush1.msra.mxu0 0.0
    %790 = vmatprep.subr.mxu0 0.0
    %791 = vmatpush1.msra.mxu0 0.0
    %792 = vmatprep.subr.mxu0 0.0
    %793 = vmatpush1.msra.mxu0 0.0
    %794 = vmatprep.subr.mxu0 0.0
    %795 = vmatpush1.msra.mxu0 0.0
    %796 = vmatprep.subr.mxu0 0.0
    %797 = vmatpush1.msra.mxu0 0.0
    %798 = vmatprep.subr.mxu0 0.0
    %799 = vmatpush1.msra.mxu0 0.0
    %800 = vmatprep.subr.mxu0 0.0
    %801 = vmatpush1.msra.mxu0 0.0
    %802 = vmatprep.subr.mxu0 0.0
    %803 = vmatpush1.msra.mxu0 0.0
    %804 = vmatprep.subr.mxu0 0.0
    %805 = vmatpush1.msra.mxu0 0.0
    %806 = vmatprep.subr.mxu0 0.0
    %807 = vmatpush1.msra.mxu0 0.0
    %808 = vmatprep.subr.mxu0 0.0
    %809 = vmatpush1.msra.mxu0 0.0
    %810 = vmatprep.subr.mxu0 0.0
    %811 = vmatpush1.msra.mxu0 0.0
    %812 = vmatprep.subr.mxu0 0.0
    %813 = vmatpush1.msra.mxu0 0.0
    %814 = vmatprep.subr.mxu0 0.0
    %815 = vmatpush1.msra.mxu0 0.0
    %816 = vmatprep.subr.mxu0 0.0
    %817 = vmatpush1.msra.mxu0 0.0
    %818 = vmatprep.subr.mxu0 0.0
    %819 = vmatpush1.msra.mxu0 0.0
    %820 = vmatprep.subr.mxu0 0.0
    %821 = vmatpush1.msra.mxu0 0.0
    %822 = vmatprep.mubr.f32.mxu0 0.0
    %823 = vmatmul.mubr.f32.gmra.mrb[0].mxu0 %v756
    %v824 = vpop.f32.mrb[0].mxu0
    %v825 = vadd.f32 0.0, %v824
    %v826 = vpop.f32.mrb[0].mxu0
    %v827 = vadd.f32 0.0, %v826
    %828 = vdwg.mxu0
    %v829 = vadd.f32 %v410, %v825
    %v830 = vadd.f32 %v411, %v827
    %v831 = vxor.u32 %v829, 2147483648
    %v832 = vxor.u32 %v830, 2147483648
    %v833 = vmul.f32 %v831, 1.442695
    %v834 = vpow.pop %v833
    %v835 = vmul.f32 %v832, 1.442695
    %v836 = vpow.pop %v835
    %v837 = vadd.f32 %v834, 1.0
    %v838 = vadd.f32 %v836, 1.0
    %v839 = vrcp.pop %v837
    %v840 = vmul.f32 1.0, %v839
    %v841 = vrcp.pop %v838
    %v842 = vmul.f32 1.0, %v841
    %v843 = vtanh.pop %v830
    %v844 = vmul.f32 %v840, %v748
    %846 = vrot.lane.b32.xlu0 %v843, 64
    %v847 = vpop.permute.xlu0 %846
    %v849 = vmul.f32 %v840, %v847
    %851 = vrot.lane.b32.xlu0 %v849, 64
    %v852 = vpop.permute.xlu0 %851
    %v854 = vadd.f32 %v844, %v852
    %v855 = vtanh.pop %v854
    %857 = vrot.lane.b32.xlu0 %v855, 64
    %v858 = vpop.permute.xlu0 %857
    %v860 = vmul.f32 %v842, %v858
    %v862 = vsel %vm436, %v860, 0
    %864 = vmatprep.subr.mxu0 %v421
    %865 = vmatpush1.msra.mxu0 %v420
    %866 = vmatprep.subr.mxu0 %v423
    %867 = vmatpush1.msra.mxu0 %v422
    %868 = vmatprep.subr.mxu0 %v425
    %869 = vmatpush1.msra.mxu0 %v424
    %870 = vmatprep.subr.mxu0 %v427
    %871 = vmatpush1.msra.mxu0 %v426
    %872 = vmatprep.subr.mxu0 %v429
    %873 = vmatpush1.msra.mxu0 %v428
    %874 = vmatprep.subr.mxu0 %v431
    %875 = vmatpush1.msra.mxu0 %v430
    %876 = vmatprep.subr.mxu0 %v433
    %877 = vmatpush1.msra.mxu0 %v432
    %878 = vmatprep.subr.mxu0 %v435
    %879 = vmatpush1.msra.mxu0 %v434
    %880 = vmatprep.subr.mxu0 0.0
    %881 = vmatpush1.msra.mxu0 0.0
    %882 = vmatprep.subr.mxu0 0.0
    %883 = vmatpush1.msra.mxu0 0.0
    %884 = vmatprep.subr.mxu0 0.0
    %885 = vmatpush1.msra.mxu0 0.0
    %886 = vmatprep.subr.mxu0 0.0
    %887 = vmatpush1.msra.mxu0 0.0
    %888 = vmatprep.subr.mxu0 0.0
    %889 = vmatpush1.msra.mxu0 0.0
    %890 = vmatprep.subr.mxu0 0.0
    %891 = vmatpush1.msra.mxu0 0.0
    %892 = vmatprep.subr.mxu0 0.0
    %893 = vmatpush1.msra.mxu0 0.0
    %894 = vmatprep.subr.mxu0 0.0
    %895 = vmatpush1.msra.mxu0 0.0
    %896 = vmatprep.subr.mxu0 0.0
    %897 = vmatpush1.msra.mxu0 0.0
    %898 = vmatprep.subr.mxu0 0.0
    %899 = vmatpush1.msra.mxu0 0.0
    %900 = vmatprep.subr.mxu0 0.0
    %901 = vmatpush1.msra.mxu0 0.0
    %902 = vmatprep.subr.mxu0 0.0
    %903 = vmatpush1.msra.mxu0 0.0
    %904 = vmatprep.subr.mxu0 0.0
    %905 = vmatpush1.msra.mxu0 0.0
    %906 = vmatprep.subr.mxu0 0.0
    %907 = vmatpush1.msra.mxu0 0.0
    %908 = vmatprep.subr.mxu0 0.0
    %909 = vmatpush1.msra.mxu0 0.0
    %910 = vmatprep.subr.mxu0 0.0
    %911 = vmatpush1.msra.mxu0 0.0
    %912 = vmatprep.subr.mxu0 0.0
    %913 = vmatpush1.msra.mxu0 0.0
    %914 = vmatprep.subr.mxu0 0.0
    %915 = vmatpush1.msra.mxu0 0.0
    %916 = vmatprep.subr.mxu0 0.0
    %917 = vmatpush1.msra.mxu0 0.0
    %918 = vmatprep.subr.mxu0 0.0
    %919 = vmatpush1.msra.mxu0 0.0
    %920 = vmatprep.subr.mxu0 0.0
    %921 = vmatpush1.msra.mxu0 0.0
    %922 = vmatprep.subr.mxu0 0.0
    %923 = vmatpush1.msra.mxu0 0.0
    %924 = vmatprep.subr.mxu0 0.0
    %925 = vmatpush1.msra.mxu0 0.0
    %926 = vmatprep.subr.mxu0 0.0
    %927 = vmatpush1.msra.mxu0 0.0
    %928 = vmatprep.mubr.f32.mxu0 0.0
    %929 = vmatmul.mubr.f32.gmra.mrb[0].mxu0 %v862
    %v930 = vpop.f32.mrb[0].mxu0
    %v931 = vadd.f32 0.0, %v930
    %v932 = vpop.f32.mrb[0].mxu0
    %v933 = vadd.f32 0.0, %v932
    %934 = vdwg.mxu0
    %v935 = vadd.f32 %v412, %v931
    %v936 = vadd.f32 %v413, %v933
    %v937 = vxor.u32 %v935, 2147483648
    %v938 = vxor.u32 %v936, 2147483648
    %v939 = vmul.f32 %v937, 1.442695
    %v940 = vpow.pop %v939
    %v941 = vmul.f32 %v938, 1.442695
    %v942 = vpow.pop %v941
    %v943 = vadd.f32 %v940, 1.0
    %v944 = vadd.f32 %v942, 1.0
    %v945 = vrcp.pop %v943
    %v946 = vmul.f32 1.0, %v945
    %v947 = vrcp.pop %v944
    %v948 = vmul.f32 1.0, %v947
    %v949 = vtanh.pop %v936
    %v950 = vmul.f32 %v946, %v854
    %952 = vrot.lane.b32.xlu0 %v949, 64
    %v953 = vpop.permute.xlu0 %952
    %v955 = vmul.f32 %v946, %v953
    %957 = vrot.lane.b32.xlu0 %v955, 64
    %v958 = vpop.permute.xlu0 %957
    %v960 = vadd.f32 %v950, %v958
    %v961 = vtanh.pop %v960
    %963 = vrot.lane.b32.xlu0 %v961, 64
    %v964 = vpop.permute.xlu0 %963
    %v966 = vmul.f32 %v948, %v964
    %v968 = vsel %vm436, %v966, 0
    %970 = vmatprep.subr.mxu0 %v421
    %971 = vmatpush1.msra.mxu0 %v420
    %972 = vmatprep.subr.mxu0 %v423
    %973 = vmatpush1.msra.mxu0 %v422
    %974 = vmatprep.subr.mxu0 %v425
    %975 = vmatpush1.msra.mxu0 %v424
    %976 = vmatprep.subr.mxu0 %v427
    %977 = vmatpush1.msra.mxu0 %v426
    %978 = vmatprep.subr.mxu0 %v429
    %979 = vmatpush1.msra.mxu0 %v428
    %980 = vmatprep.subr.mxu0 %v431
    %981 = vmatpush1.msra.mxu0 %v430
    %982 = vmatprep.subr.mxu0 %v433
    %983 = vmatpush1.msra.mxu0 %v432
    %984 = vmatprep.subr.mxu0 %v435
    %985 = vmatpush1.msra.mxu0 %v434
    %986 = vmatprep.subr.mxu0 0.0
    %987 = vmatpush1.msra.mxu0 0.0
    %988 = vmatprep.subr.mxu0 0.0
    %989 = vmatpush1.msra.mxu0 0.0
    %990 = vmatprep.subr.mxu0 0.0
    %991 = vmatpush1.msra.mxu0 0.0
    %992 = vmatprep.subr.mxu0 0.0
    %993 = vmatpush1.msra.mxu0 0.0
    %994 = vmatprep.subr.mxu0 0.0
    %995 = vmatpush1.msra.mxu0 0.0
    %996 = vmatprep.subr.mxu0 0.0
    %997 = vmatpush1.msra.mxu0 0.0
    %998 = vmatprep.subr.mxu0 0.0
    %999 = vmatpush1.msra.mxu0 0.0
    %1000 = vmatprep.subr.mxu0 0.0
    %1001 = vmatpush1.msra.mxu0 0.0
    %1002 = vmatprep.subr.mxu0 0.0
    %1003 = vmatpush1.msra.mxu0 0.0
    %1004 = vmatprep.subr.mxu0 0.0
    %1005 = vmatpush1.msra.mxu0 0.0
    %1006 = vmatprep.subr.mxu0 0.0
    %1007 = vmatpush1.msra.mxu0 0.0
    %1008 = vmatprep.subr.mxu0 0.0
    %1009 = vmatpush1.msra.mxu0 0.0
    %1010 = vmatprep.subr.mxu0 0.0
    %1011 = vmatpush1.msra.mxu0 0.0
    %1012 = vmatprep.subr.mxu0 0.0
    %1013 = vmatpush1.msra.mxu0 0.0
    %1014 = vmatprep.subr.mxu0 0.0
    %1015 = vmatpush1.msra.mxu0 0.0
    %1016 = vmatprep.subr.mxu0 0.0
    %1017 = vmatpush1.msra.mxu0 0.0
    %1018 = vmatprep.subr.mxu0 0.0
    %1019 = vmatpush1.msra.mxu0 0.0
    %1020 = vmatprep.subr.mxu0 0.0
    %1021 = vmatpush1.msra.mxu0 0.0
    %1022 = vmatprep.subr.mxu0 0.0
    %1023 = vmatpush1.msra.mxu0 0.0
    %1024 = vmatprep.subr.mxu0 0.0
    %1025 = vmatpush1.msra.mxu0 0.0
    %1026 = vmatprep.subr.mxu0 0.0
    %1027 = vmatpush1.msra.mxu0 0.0
    %1028 = vmatprep.subr.mxu0 0.0
    %1029 = vmatpush1.msra.mxu0 0.0
    %1030 = vmatprep.subr.mxu0 0.0
    %1031 = vmatpush1.msra.mxu0 0.0
    %1032 = vmatprep.subr.mxu0 0.0
    %1033 = vmatpush1.msra.mxu0 0.0
    %1034 = vmatprep.mubr.f32.mxu0 0.0
    %1035 = vmatmul.mubr.f32.gmra.mrb[0].mxu0 %v968
    %v1036 = vpop.f32.mrb[0].mxu0
    %v1037 = vadd.f32 0.0, %v1036
    %v1038 = vpop.f32.mrb[0].mxu0
    %v1039 = vadd.f32 0.0, %v1038
    %1040 = vdwg.mxu0
    %v1041 = vadd.f32 %v414, %v1037
    %v1042 = vadd.f32 %v415, %v1039
    %v1043 = vxor.u32 %v1041, 2147483648
    %v1044 = vxor.u32 %v1042, 2147483648
    %v1045 = vmul.f32 %v1043, 1.442695
    %v1046 = vpow.pop %v1045
    %v1047 = vmul.f32 %v1044, 1.442695
    %v1048 = vpow.pop %v1047
    %v1049 = vadd.f32 %v1046, 1.0
    %v1050 = vadd.f32 %v1048, 1.0
    %v1051 = vrcp.pop %v1049
    %v1052 = vmul.f32 1.0, %v1051
    %v1053 = vrcp.pop %v1050
    %v1054 = vmul.f32 1.0, %v1053
    %v1055 = vtanh.pop %v1042
    %v1056 = vmul.f32 %v1052, %v960
    %1058 = vrot.lane.b32.xlu0 %v1055, 64
    %v1059 = vpop.permute.xlu0 %1058
    %v1061 = vmul.f32 %v1052, %v1059
    %1063 = vrot.lane.b32.xlu0 %v1061, 64
    %v1064 = vpop.permute.xlu0 %1063
    %v1066 = vadd.f32 %v1056, %v1064
    %v1067 = vtanh.pop %v1066
    %1069 = vrot.lane.b32.xlu0 %v1067, 64
    %v1070 = vpop.permute.xlu0 %1069
    %v1072 = vmul.f32 %v1054, %v1070
    %v1074 = vsel %vm436, %v1072, 0
    %1076 = vmatprep.subr.mxu0 %v421
    %1077 = vmatpush1.msra.mxu0 %v420
    %1078 = vmatprep.subr.mxu0 %v423
    %1079 = vmatpush1.msra.mxu0 %v422
    %1080 = vmatprep.subr.mxu0 %v425
    %1081 = vmatpush1.msra.mxu0 %v424
    %1082 = vmatprep.subr.mxu0 %v427
    %1083 = vmatpush1.msra.mxu0 %v426
    %1084 = vmatprep.subr.mxu0 %v429
    %1085 = vmatpush1.msra.mxu0 %v428
    %1086 = vmatprep.subr.mxu0 %v431
    %1087 = vmatpush1.msra.mxu0 %v430
    %1088 = vmatprep.subr.mxu0 %v433
    %1089 = vmatpush1.msra.mxu0 %v432
    %1090 = vmatprep.subr.mxu0 %v435
    %1091 = vmatpush1.msra.mxu0 %v434
    %1092 = vmatprep.subr.mxu0 0.0
    %1093 = vmatpush1.msra.mxu0 0.0
    %1094 = vmatprep.subr.mxu0 0.0
    %1095 = vmatpush1.msra.mxu0 0.0
    %1096 = vmatprep.subr.mxu0 0.0
    %1097 = vmatpush1.msra.mxu0 0.0
    %1098 = vmatprep.subr.mxu0 0.0
    %1099 = vmatpush1.msra.mxu0 0.0
    %1100 = vmatprep.subr.mxu0 0.0
    %1101 = vmatpush1.msra.mxu0 0.0
    %1102 = vmatprep.subr.mxu0 0.0
    %1103 = vmatpush1.msra.mxu0 0.0
    %1104 = vmatprep.subr.mxu0 0.0
    %1105 = vmatpush1.msra.mxu0 0.0
    %1106 = vmatprep.subr.mxu0 0.0
    %1107 = vmatpush1.msra.mxu0 0.0
    %1108 = vmatprep.subr.mxu0 0.0
    %1109 = vmatpush1.msra.mxu0 0.0
    %1110 = vmatprep.subr.mxu0 0.0
    %1111 = vmatpush1.msra.mxu0 0.0
    %1112 = vmatprep.subr.mxu0 0.0
    %1113 = vmatpush1.msra.mxu0 0.0
    %1114 = vmatprep.subr.mxu0 0.0
    %1115 = vmatpush1.msra.mxu0 0.0
    %1116 = vmatprep.subr.mxu0 0.0
    %1117 = vmatpush1.msra.mxu0 0.0
    %1118 = vmatprep.subr.mxu0 0.0
    %1119 = vmatpush1.msra.mxu0 0.0
    %1120 = vmatprep.subr.mxu0 0.0
    %1121 = vmatpush1.msra.mxu0 0.0
    %1122 = vmatprep.subr.mxu0 0.0
    %1123 = vmatpush1.msra.mxu0 0.0
    %1124 = vmatprep.subr.mxu0 0.0
    %1125 = vmatpush1.msra.mxu0 0.0
    %1126 = vmatprep.subr.mxu0 0.0
    %1127 = vmatpush1.msra.mxu0 0.0
    %1128 = vmatprep.subr.mxu0 0.0
    %1129 = vmatpush1.msra.mxu0 0.0
    %1130 = vmatprep.subr.mxu0 0.0
    %1131 = vmatpush1.msra.mxu0 0.0
    %1132 = vmatprep.subr.mxu0 0.0
    %1133 = vmatpush1.msra.mxu0 0.0
    %1134 = vmatprep.subr.mxu0 0.0
    %1135 = vmatpush1.msra.mxu0 0.0
    %1136 = vmatprep.subr.mxu0 0.0
    %1137 = vmatpush1.msra.mxu0 0.0
    %1138 = vmatprep.subr.mxu0 0.0
    %1139 = vmatpush1.msra.mxu0 0.0
    %1140 = vmatprep.mubr.f32.mxu0 0.0
    %1141 = vmatmul.mubr.f32.gmra.mrb[0].mxu0 %v1074
    %v1142 = vpop.f32.mrb[0].mxu0
    %v1143 = vadd.f32 0.0, %v1142
    %v1144 = vpop.f32.mrb[0].mxu0
    %v1145 = vadd.f32 0.0, %v1144
    %1146 = vdwg.mxu0
    %v1147 = vadd.f32 %v416, %v1143
    %v1148 = vadd.f32 %v417, %v1145
    %v1149 = vxor.u32 %v1147, 2147483648
    %v1150 = vxor.u32 %v1148, 2147483648
    %v1151 = vmul.f32 %v1149, 1.442695
    %v1152 = vpow.pop %v1151
    %v1153 = vmul.f32 %v1150, 1.442695
    %v1154 = vpow.pop %v1153
    %v1155 = vadd.f32 %v1152, 1.0
    %v1156 = vadd.f32 %v1154, 1.0
    %v1157 = vrcp.pop %v1155
    %v1158 = vmul.f32 1.0, %v1157
    %v1159 = vrcp.pop %v1156
    %v1160 = vmul.f32 1.0, %v1159
    %v1161 = vtanh.pop %v1148
    %v1162 = vmul.f32 %v1158, %v1066
    %1164 = vrot.lane.b32.xlu0 %v1161, 64
    %v1165 = vpop.permute.xlu0 %1164
    %v1167 = vmul.f32 %v1158, %v1165
    %1169 = vrot.lane.b32.xlu0 %v1167, 64
    %v1170 = vpop.permute.xlu0 %1169
    %v1172 = vadd.f32 %v1162, %v1170
    %v1173 = vtanh.pop %v1172
    %1175 = vrot.lane.b32.xlu0 %v1173, 64
    %v1176 = vpop.permute.xlu0 %1175
    %v1178 = vmul.f32 %v1160, %v1176
    %v1180 = vsel %vm436, %v1178, 0
    %1182 = vmatprep.subr.mxu0 %v421
    %1183 = vmatpush1.msra.mxu0 %v420
    %1184 = vmatprep.subr.mxu0 %v423
    %1185 = vmatpush1.msra.mxu0 %v422
    %1186 = vmatprep.subr.mxu0 %v425
    %1187 = vmatpush1.msra.mxu0 %v424
    %1188 = vmatprep.subr.mxu0 %v427
    %1189 = vmatpush1.msra.mxu0 %v426
    %1190 = vmatprep.subr.mxu0 %v429
    %1191 = vmatpush1.msra.mxu0 %v428
    %1192 = vmatprep.subr.mxu0 %v431
    %1193 = vmatpush1.msra.mxu0 %v430
    %1194 = vmatprep.subr.mxu0 %v433
    %1195 = vmatpush1.msra.mxu0 %v432
    %1196 = vmatprep.subr.mxu0 %v435
    %1197 = vmatpush1.msra.mxu0 %v434
    %1198 = vmatprep.subr.mxu0 0.0
    %1199 = vmatpush1.msra.mxu0 0.0
    %1200 = vmatprep.subr.mxu0 0.0
    %1201 = vmatpush1.msra.mxu0 0.0
    %1202 = vmatprep.subr.mxu0 0.0
    %1203 = vmatpush1.msra.mxu0 0.0
    %1204 = vmatprep.subr.mxu0 0.0
    %1205 = vmatpush1.msra.mxu0 0.0
    %1206 = vmatprep.subr.mxu0 0.0
    %1207 = vmatpush1.msra.mxu0 0.0
    %1208 = vmatprep.subr.mxu0 0.0
    %1209 = vmatpush1.msra.mxu0 0.0
    %1210 = vmatprep.subr.mxu0 0.0
    %1211 = vmatpush1.msra.mxu0 0.0
    %1212 = vmatprep.subr.mxu0 0.0
    %1213 = vmatpush1.msra.mxu0 0.0
    %1214 = vmatprep.subr.mxu0 0.0
    %1215 = vmatpush1.msra.mxu0 0.0
    %1216 = vmatprep.subr.mxu0 0.0
    %1217 = vmatpush1.msra.mxu0 0.0
    %1218 = vmatprep.subr.mxu0 0.0
    %1219 = vmatpush1.msra.mxu0 0.0
    %1220 = vmatprep.subr.mxu0 0.0
    %1221 = vmatpush1.msra.mxu0 0.0
    %1222 = vmatprep.subr.mxu0 0.0
    %1223 = vmatpush1.msra.mxu0 0.0
    %1224 = vmatprep.subr.mxu0 0.0
    %1225 = vmatpush1.msra.mxu0 0.0
    %1226 = vmatprep.subr.mxu0 0.0
    %1227 = vmatpush1.msra.mxu0 0.0
    %1228 = vmatprep.subr.mxu0 0.0
    %1229 = vmatpush1.msra.mxu0 0.0
    %1230 = vmatprep.subr.mxu0 0.0
    %1231 = vmatpush1.msra.mxu0 0.0
    %1232 = vmatprep.subr.mxu0 0.0
    %1233 = vmatpush1.msra.mxu0 0.0
    %1234 = vmatprep.subr.mxu0 0.0
    %1235 = vmatpush1.msra.mxu0 0.0
    %1236 = vmatprep.subr.mxu0 0.0
    %1237 = vmatpush1.msra.mxu0 0.0
    %1238 = vmatprep.subr.mxu0 0.0
    %1239 = vmatpush1.msra.mxu0 0.0
    %1240 = vmatprep.subr.mxu0 0.0
    %1241 = vmatpush1.msra.mxu0 0.0
    %1242 = vmatprep.subr.mxu0 0.0
    %1243 = vmatpush1.msra.mxu0 0.0
    %1244 = vmatprep.subr.mxu0 0.0
    %1245 = vmatpush1.msra.mxu0 0.0
    %1246 = vmatprep.mubr.f32.mxu0 0.0
    %1247 = vmatmul.mubr.f32.gmra.mrb[0].mxu0 %v1180
    %v1248 = vpop.f32.mrb[0].mxu0
    %v1249 = vadd.f32 0.0, %v1248
    %v1250 = vpop.f32.mrb[0].mxu0
    %v1251 = vadd.f32 0.0, %v1250
    %1252 = vdwg.mxu0
    %v1253 = vadd.f32 %v418, %v1249
    %v1254 = vadd.f32 %v419, %v1251
    %v1255 = vxor.u32 %v1253, 2147483648
    %v1256 = vxor.u32 %v1254, 2147483648
    %v1257 = vmul.f32 %v1255, 1.442695
    %v1258 = vpow.pop %v1257
    %v1259 = vmul.f32 %v1256, 1.442695
    %v1260 = vpow.pop %v1259
    %v1261 = vadd.f32 %v1258, 1.0
    %v1262 = vadd.f32 %v1260, 1.0
    %v1263 = vrcp.pop %v1261
    %v1264 = vmul.f32 1.0, %v1263
    %v1265 = vrcp.pop %v1262
    %v1266 = vmul.f32 1.0, %v1265
    %v1267 = vtanh.pop %v1254
    %v1268 = vmul.f32 %v1264, %v1172
    %1270 = vrot.lane.b32.xlu0 %v1267, 64
    %v1271 = vpop.permute.xlu0 %1270
    %v1273 = vmul.f32 %v1264, %v1271
    %1275 = vrot.lane.b32.xlu0 %v1273, 64
    %v1276 = vpop.permute.xlu0 %1275
    %v1278 = vadd.f32 %v1268, %v1276
    %v1279 = vtanh.pop %v1278
    %1281 = vrot.lane.b32.xlu0 %v1279, 64
    %v1282 = vpop.permute.xlu0 %1281
    %v1284 = vmul.f32 %v1266, %v1282
    %v1285 = vld [vmem:[%s6] sm:$0xff]
    %v1286 = vld [vmem:[%s6 + $0x8] sm:$0xff]
    %v1287 = vld [vmem:[%s6 + $0x10] sm:$0xff]
    %v1288 = vld [vmem:[%s6 + $0x18] sm:$0xff]
    %v1289 = vld [vmem:[%s6 + $0x20] sm:$0xff]
    %v1290 = vld [vmem:[%s6 + $0x28] sm:$0xff]
    %v1291 = vld [vmem:[%s6 + $0x30] sm:$0xff]
    %v1292 = vld [vmem:[%s6 + $0x38] sm:$0xff]
    %v1293 = vld [vmem:[%s6 + $0x40] sm:$0xff]
    %v1294 = vld [vmem:[%s6 + $0x48] sm:$0xff]
    %v1295 = vld [vmem:[%s6 + $0x50] sm:$0xff]
    %v1296 = vld [vmem:[%s6 + $0x58] sm:$0xff]
    %v1297 = vld [vmem:[%s6 + $0x60] sm:$0xff]
    %v1298 = vld [vmem:[%s6 + $0x68] sm:$0xff]
    %v1299 = vld [vmem:[%s6 + $0x70] sm:$0xff]
    %v1300 = vld [vmem:[%s6 + $0x78] sm:$0xff]
    %v1301 = vld [vmem:[%s7] sm:$0x3]
    %v1303 = vlaneseq
    %v1304 = vshrl.u32 %v1303, 7
    %v1305 = vsub.s32 0, %v1304
    %v1306 = vrot.slane %v1301, %v1305
    %v1307 = vlaneseq
    %v1308 = vshrl.u32 %v1307, 7
    %v1309 = vsub.s32 1, %v1308
    %v1310 = vrot.slane %v1301, %v1309
    %v1314 = vsel %vm436, %v1284, 0
    %1316 = vmatprep.subr.mxu0 %v1286
    %1317 = vmatpush1.msra.mxu0 %v1285
    %1318 = vmatprep.subr.mxu0 %v1288
    %1319 = vmatpush1.msra.mxu0 %v1287
    %1320 = vmatprep.subr.mxu0 %v1290
    %1321 = vmatpush1.msra.mxu0 %v1289
    %1322 = vmatprep.subr.mxu0 %v1292
    %1323 = vmatpush1.msra.mxu0 %v1291
    %1324 = vmatprep.subr.mxu0 %v1294
    %1325 = vmatpush1.msra.mxu0 %v1293
    %1326 = vmatprep.subr.mxu0 %v1296
    %1327 = vmatpush1.msra.mxu0 %v1295
    %1328 = vmatprep.subr.mxu0 %v1298
    %1329 = vmatpush1.msra.mxu0 %v1297
    %1330 = vmatprep.subr.mxu0 %v1300
    %1331 = vmatpush1.msra.mxu0 %v1299
    %1332 = vmatprep.subr.mxu0 0.0
    %1333 = vmatpush1.msra.mxu0 0.0
    %1334 = vmatprep.subr.mxu0 0.0
    %1335 = vmatpush1.msra.mxu0 0.0
    %1336 = vmatprep.subr.mxu0 0.0
    %1337 = vmatpush1.msra.mxu0 0.0
    %1338 = vmatprep.subr.mxu0 0.0
    %1339 = vmatpush1.msra.mxu0 0.0
    %1340 = vmatprep.subr.mxu0 0.0
    %1341 = vmatpush1.msra.mxu0 0.0
    %1342 = vmatprep.subr.mxu0 0.0
    %1343 = vmatpush1.msra.mxu0 0.0
    %1344 = vmatprep.subr.mxu0 0.0
    %1345 = vmatpush1.msra.mxu0 0.0
    %1346 = vmatprep.subr.mxu0 0.0
    %1347 = vmatpush1.msra.mxu0 0.0
    %1348 = vmatprep.subr.mxu0 0.0
    %1349 = vmatpush1.msra.mxu0 0.0
    %1350 = vmatprep.subr.mxu0 0.0
    %1351 = vmatpush1.msra.mxu0 0.0
    %1352 = vmatprep.subr.mxu0 0.0
    %1353 = vmatpush1.msra.mxu0 0.0
    %1354 = vmatprep.subr.mxu0 0.0
    %1355 = vmatpush1.msra.mxu0 0.0
    %1356 = vmatprep.subr.mxu0 0.0
    %1357 = vmatpush1.msra.mxu0 0.0
    %1358 = vmatprep.subr.mxu0 0.0
    %1359 = vmatpush1.msra.mxu0 0.0
    %1360 = vmatprep.subr.mxu0 0.0
    %1361 = vmatpush1.msra.mxu0 0.0
    %1362 = vmatprep.subr.mxu0 0.0
    %1363 = vmatpush1.msra.mxu0 0.0
    %1364 = vmatprep.subr.mxu0 0.0
    %1365 = vmatpush1.msra.mxu0 0.0
    %1366 = vmatprep.subr.mxu0 0.0
    %1367 = vmatpush1.msra.mxu0 0.0
    %1368 = vmatprep.subr.mxu0 0.0
    %1369 = vmatpush1.msra.mxu0 0.0
    %1370 = vmatprep.subr.mxu0 0.0
    %1371 = vmatpush1.msra.mxu0 0.0
    %1372 = vmatprep.subr.mxu0 0.0
    %1373 = vmatpush1.msra.mxu0 0.0
    %1374 = vmatprep.subr.mxu0 0.0
    %1375 = vmatpush1.msra.mxu0 0.0
    %1376 = vmatprep.subr.mxu0 0.0
    %1377 = vmatpush1.msra.mxu0 0.0
    %1378 = vmatprep.subr.mxu0 0.0
    %1379 = vmatpush1.msra.mxu0 0.0
    %1380 = vmatprep.mubr.f32.mxu0 0.0
    %1381 = vmatmul.mubr.f32.gmra.mrb[0].mxu0 %v544
    %v1382 = vpop.f32.mrb[0].mxu0
    %v1383 = vadd.f32 %v1306, %v1382
    %v1384 = vpop.f32.mrb[0].mxu0
    %v1385 = vadd.f32 %v1310, %v1384
    %1386 = vmatprep.mubr.f32.mxu0 0.0
    %1387 = vmatmul.mubr.f32.gmra.mrb[0].mxu0 %v650
    %v1388 = vpop.f32.mrb[0].mxu0
    %v1389 = vadd.f32 %v1306, %v1388
    %v1390 = vpop.f32.mrb[0].mxu0
    %v1391 = vadd.f32 %v1310, %v1390
    %1392 = vmatprep.mubr.f32.mxu0 0.0
    %1393 = vmatmul.mubr.f32.gmra.mrb[0].mxu0 %v756
    %v1394 = vpop.f32.mrb[0].mxu0
    %v1395 = vadd.f32 %v1306, %v1394
    %v1396 = vpop.f32.mrb[0].mxu0
    %v1397 = vadd.f32 %v1310, %v1396
    %1398 = vmatprep.mubr.f32.mxu0 0.0
    %1399 = vmatmul.mubr.f32.gmra.mrb[0].mxu0 %v862
    %v1400 = vpop.f32.mrb[0].mxu0
    %v1401 = vadd.f32 %v1306, %v1400
    %v1402 = vpop.f32.mrb[0].mxu0
    %v1403 = vadd.f32 %v1310, %v1402
    %1404 = vmatprep.mubr.f32.mxu0 0.0
    %1405 = vmatmul.mubr.f32.gmra.mrb[0].mxu0 %v968
    %v1406 = vpop.f32.mrb[0].mxu0
    %v1407 = vadd.f32 %v1306, %v1406
    %v1408 = vpop.f32.mrb[0].mxu0
    %v1409 = vadd.f32 %v1310, %v1408
    %1410 = vmatprep.mubr.f32.mxu0 0.0
    %1411 = vmatmul.mubr.f32.gmra.mrb[0].mxu0 %v1074
    %v1412 = vpop.f32.mrb[0].mxu0
    %v1413 = vadd.f32 %v1306, %v1412
    %v1414 = vpop.f32.mrb[0].mxu0
    %v1415 = vadd.f32 %v1310, %v1414
    %1416 = vmatprep.mubr.f32.mxu0 0.0
    %1417 = vmatmul.mubr.f32.gmra.mrb[0].mxu0 %v1180
    %v1418 = vpop.f32.mrb[0].mxu0
    %v1419 = vadd.f32 %v1306, %v1418
    %v1420 = vpop.f32.mrb[0].mxu0
    %v1421 = vadd.f32 %v1310, %v1420
    %1422 = vmatprep.mubr.f32.mxu0 0.0
    %1423 = vmatmul.mubr.f32.gmra.mrb[0].mxu0 %v1314
    %v1424 = vpop.f32.mrb[0].mxu0
    %v1425 = vadd.f32 %v1306, %v1424
    %v1426 = vpop.f32.mrb[0].mxu0
    %v1427 = vadd.f32 %v1310, %v1426
    %1428 = vdwg.mxu0
    %v1429 = vld [vmem:[#allocation7] sm:$0xff]
    %v1430 = vld [vmem:[#allocation7 + $0x8] sm:$0xff]
    %v1431 = vld [vmem:[#allocation7 + $0x10] sm:$0xff]
    %v1432 = vld [vmem:[#allocation7 + $0x18] sm:$0xff]
    %v1433 = vld [vmem:[#allocation7 + $0x20] sm:$0xff]
    %v1434 = vld [vmem:[#allocation7 + $0x28] sm:$0xff]
    %v1435 = vld [vmem:[#allocation7 + $0x30] sm:$0xff]
    %v1436 = vld [vmem:[#allocation7 + $0x38] sm:$0xff]
    %v1437 = vld [vmem:[#allocation7 + $0x40] sm:$0xff]
    %v1438 = vld [vmem:[#allocation7 + $0x48] sm:$0xff]
    %v1439 = vld [vmem:[#allocation7 + $0x50] sm:$0xff]
    %v1440 = vld [vmem:[#allocation7 + $0x58] sm:$0xff]
    %v1441 = vld [vmem:[#allocation7 + $0x60] sm:$0xff]
    %v1442 = vld [vmem:[#allocation7 + $0x68] sm:$0xff]
    %v1443 = vld [vmem:[#allocation7 + $0x70] sm:$0xff]
    %v1444 = vld [vmem:[#allocation7 + $0x78] sm:$0xff]
    %1445 = vmatprep.subr.mxu0 %v1430
    %1446 = vmatpush1.msra.mxu0 %v1429
    %1447 = vmatprep.subr.mxu0 %v1432
    %1448 = vmatpush1.msra.mxu0 %v1431
    %1449 = vmatprep.subr.mxu0 %v1434
    %1450 = vmatpush1.msra.mxu0 %v1433
    %1451 = vmatprep.subr.mxu0 %v1436
    %1452 = vmatpush1.msra.mxu0 %v1435
    %1453 = vmatprep.subr.mxu0 %v1438
    %1454 = vmatpush1.msra.mxu0 %v1437
    %1455 = vmatprep.subr.mxu0 %v1440
    %1456 = vmatpush1.msra.mxu0 %v1439
    %1457 = vmatprep.subr.mxu0 %v1442
    %1458 = vmatpush1.msra.mxu0 %v1441
    %1459 = vmatprep.subr.mxu0 %v1444
    %1460 = vmatpush1.msra.mxu0 %v1443
    %1461 = vmatprep.subr.mxu0 0.0
    %1462 = vmatpush1.msra.mxu0 0.0
    %1463 = vmatprep.subr.mxu0 0.0
    %1464 = vmatpush1.msra.mxu0 0.0
    %1465 = vmatprep.subr.mxu0 0.0
    %1466 = vmatpush1.msra.mxu0 0.0
    %1467 = vmatprep.subr.mxu0 0.0
    %1468 = vmatpush1.msra.mxu0 0.0
    %1469 = vmatprep.subr.mxu0 0.0
    %1470 = vmatpush1.msra.mxu0 0.0
    %1471 = vmatprep.subr.mxu0 0.0
    %1472 = vmatpush1.msra.mxu0 0.0
    %1473 = vmatprep.subr.mxu0 0.0
    %1474 = vmatpush1.msra.mxu0 0.0
    %1475 = vmatprep.subr.mxu0 0.0
    %1476 = vmatpush1.msra.mxu0 0.0
    %1477 = vmatprep.subr.mxu0 0.0
    %1478 = vmatpush1.msra.mxu0 0.0
    %1479 = vmatprep.subr.mxu0 0.0
    %1480 = vmatpush1.msra.mxu0 0.0
    %1481 = vmatprep.subr.mxu0 0.0
    %1482 = vmatpush1.msra.mxu0 0.0
    %1483 = vmatprep.subr.mxu0 0.0
    %1484 = vmatpush1.msra.mxu0 0.0
    %1485 = vmatprep.subr.mxu0 0.0
    %1486 = vmatpush1.msra.mxu0 0.0
    %1487 = vmatprep.subr.mxu0 0.0
    %1488 = vmatpush1.msra.mxu0 0.0
    %1489 = vmatprep.subr.mxu0 0.0
    %1490 = vmatpush1.msra.mxu0 0.0
    %1491 = vmatprep.subr.mxu0 0.0
    %1492 = vmatpush1.msra.mxu0 0.0
    %1493 = vmatprep.subr.mxu0 0.0
    %1494 = vmatpush1.msra.mxu0 0.0
    %1495 = vmatprep.subr.mxu0 0.0
    %1496 = vmatpush1.msra.mxu0 0.0
    %1497 = vmatprep.subr.mxu0 0.0
    %1498 = vmatpush1.msra.mxu0 0.0
    %1499 = vmatprep.subr.mxu0 0.0
    %1500 = vmatpush1.msra.mxu0 0.0
    %1501 = vmatprep.subr.mxu0 0.0
    %1502 = vmatpush1.msra.mxu0 0.0
    %1503 = vmatprep.subr.mxu0 0.0
    %1504 = vmatpush1.msra.mxu0 0.0
    %1505 = vmatprep.subr.mxu0 0.0
    %1506 = vmatpush1.msra.mxu0 0.0
    %1507 = vmatprep.subr.mxu0 0.0
    %1508 = vmatpush1.msra.mxu0 0.0
    %1509 = vmatprep.mubr.f32.mxu0 0.0
    %1510 = vmatmul.mubr.f32.gmra.mrb[0].mxu0 %v438
    %v1511 = vpop.f32.mrb[0].mxu0
    %v1512 = vadd.f32 0.0, %v1511
    %v1513 = vpop.f32.mrb[0].mxu0
    %v1514 = vadd.f32 0.0, %v1513
    %1515 = vdwg.mxu0
    %v1516 = vadd.f32 %v1383, %v1512
    %v1517 = vadd.f32 %v1385, %v1514
    %v1518 = vxor.u32 %v1516, 2147483648
    %v1519 = vxor.u32 %v1517, 2147483648
    %v1520 = vmul.f32 %v1518, 1.442695
    %v1521 = vpow.pop %v1520
    %v1522 = vmul.f32 %v1519, 1.442695
    %v1523 = vpow.pop %v1522
    %v1524 = vadd.f32 %v1521, 1.0
    %v1525 = vadd.f32 %v1523, 1.0
    %v1526 = vrcp.pop %v1524
    %v1527 = vmul.f32 1.0, %v1526
    %v1528 = vrcp.pop %v1525
    %v1529 = vmul.f32 1.0, %v1528
    %v1530 = vtanh.pop %v1517
    %v1531 = vmul.f32 %v1527, 0.0
    %1533 = vrot.lane.b32.xlu0 %v1530, 64
    %v1534 = vpop.permute.xlu0 %1533
    %v1536 = vmul.f32 %v1527, %v1534
    %1538 = vrot.lane.b32.xlu0 %v1536, 64
    %v1539 = vpop.permute.xlu0 %1538
    %v1541 = vadd.f32 %v1531, %v1539
    %v1542 = vtanh.pop %v1541
    %1544 = vrot.lane.b32.xlu0 %v1542, 64
    %v1545 = vpop.permute.xlu0 %1544
    %v1547 = vmul.f32 %v1529, %v1545
    %v1549 = vsel %vm436, %v1547, 0
    %1551 = vmatprep.subr.mxu0 %v1430
    %1552 = vmatpush1.msra.mxu0 %v1429
    %1553 = vmatprep.subr.mxu0 %v1432
    %1554 = vmatpush1.msra.mxu0 %v1431
    %1555 = vmatprep.subr.mxu0 %v1434
    %1556 = vmatpush1.msra.mxu0 %v1433
    %1557 = vmatprep.subr.mxu0 %v1436
    %1558 = vmatpush1.msra.mxu0 %v1435
    %1559 = vmatprep.subr.mxu0 %v1438
    %1560 = vmatpush1.msra.mxu0 %v1437
    %1561 = vmatprep.subr.mxu0 %v1440
    %1562 = vmatpush1.msra.mxu0 %v1439
    %1563 = vmatprep.subr.mxu0 %v1442
    %1564 = vmatpush1.msra.mxu0 %v1441
    %1565 = vmatprep.subr.mxu0 %v1444
    %1566 = vmatpush1.msra.mxu0 %v1443
    %1567 = vmatprep.subr.mxu0 0.0
    %1568 = vmatpush1.msra.mxu0 0.0
    %1569 = vmatprep.subr.mxu0 0.0
    %1570 = vmatpush1.msra.mxu0 0.0
    %1571 = vmatprep.subr.mxu0 0.0
    %1572 = vmatpush1.msra.mxu0 0.0
    %1573 = vmatprep.subr.mxu0 0.0
    %1574 = vmatpush1.msra.mxu0 0.0
    %1575 = vmatprep.subr.mxu0 0.0
    %1576 = vmatpush1.msra.mxu0 0.0
    %1577 = vmatprep.subr.mxu0 0.0
    %1578 = vmatpush1.msra.mxu0 0.0
    %1579 = vmatprep.subr.mxu0 0.0
    %1580 = vmatpush1.msra.mxu0 0.0
    %1581 = vmatprep.subr.mxu0 0.0
    %1582 = vmatpush1.msra.mxu0 0.0
    %1583 = vmatprep.subr.mxu0 0.0
    %1584 = vmatpush1.msra.mxu0 0.0
    %1585 = vmatprep.subr.mxu0 0.0
    %1586 = vmatpush1.msra.mxu0 0.0
    %1587 = vmatprep.subr.mxu0 0.0
    %1588 = vmatpush1.msra.mxu0 0.0
    %1589 = vmatprep.subr.mxu0 0.0
    %1590 = vmatpush1.msra.mxu0 0.0
    %1591 = vmatprep.subr.mxu0 0.0
    %1592 = vmatpush1.msra.mxu0 0.0
    %1593 = vmatprep.subr.mxu0 0.0
    %1594 = vmatpush1.msra.mxu0 0.0
    %1595 = vmatprep.subr.mxu0 0.0
    %1596 = vmatpush1.msra.mxu0 0.0
    %1597 = vmatprep.subr.mxu0 0.0
    %1598 = vmatpush1.msra.mxu0 0.0
    %1599 = vmatprep.subr.mxu0 0.0
    %1600 = vmatpush1.msra.mxu0 0.0
    %1601 = vmatprep.subr.mxu0 0.0
    %1602 = vmatpush1.msra.mxu0 0.0
    %1603 = vmatprep.subr.mxu0 0.0
    %1604 = vmatpush1.msra.mxu0 0.0
    %1605 = vmatprep.subr.mxu0 0.0
    %1606 = vmatpush1.msra.mxu0 0.0
    %1607 = vmatprep.subr.mxu0 0.0
    %1608 = vmatpush1.msra.mxu0 0.0
    %1609 = vmatprep.subr.mxu0 0.0
    %1610 = vmatpush1.msra.mxu0 0.0
    %1611 = vmatprep.subr.mxu0 0.0
    %1612 = vmatpush1.msra.mxu0 0.0
    %1613 = vmatprep.subr.mxu0 0.0
    %1614 = vmatpush1.msra.mxu0 0.0
    %1615 = vmatprep.mubr.f32.mxu0 0.0
    %1616 = vmatmul.mubr.f32.gmra.mrb[0].mxu0 %v1549
    %v1617 = vpop.f32.mrb[0].mxu0
    %v1618 = vadd.f32 0.0, %v1617
    %v1619 = vpop.f32.mrb[0].mxu0
    %v1620 = vadd.f32 0.0, %v1619
    %1621 = vdwg.mxu0
    %v1622 = vadd.f32 %v1389, %v1618
    %v1623 = vadd.f32 %v1391, %v1620
    %v1624 = vxor.u32 %v1622, 2147483648
    %v1625 = vxor.u32 %v1623, 2147483648
    %v1626 = vmul.f32 %v1624, 1.442695
    %v1627 = vpow.pop %v1626
    %v1628 = vmul.f32 %v1625, 1.442695
    %v1629 = vpow.pop %v1628
    %v1630 = vadd.f32 %v1627, 1.0
    %v1631 = vadd.f32 %v1629, 1.0
    %v1632 = vrcp.pop %v1630
    %v1633 = vmul.f32 1.0, %v1632
    %v1634 = vrcp.pop %v1631
    %v1635 = vmul.f32 1.0, %v1634
    %v1636 = vtanh.pop %v1623
    %v1637 = vmul.f32 %v1633, %v1541
    %1639 = vrot.lane.b32.xlu0 %v1636, 64
    %v1640 = vpop.permute.xlu0 %1639
    %v1642 = vmul.f32 %v1633, %v1640
    %1644 = vrot.lane.b32.xlu0 %v1642, 64
    %v1645 = vpop.permute.xlu0 %1644
    %v1647 = vadd.f32 %v1637, %v1645
    %v1648 = vtanh.pop %v1647
    %1650 = vrot.lane.b32.xlu0 %v1648, 64
    %v1651 = vpop.permute.xlu0 %1650
    %v1653 = vmul.f32 %v1635, %v1651
    %v1655 = vsel %vm436, %v1653, 0
    %1657 = vmatprep.subr.mxu0 %v1430
    %1658 = vmatpush1.msra.mxu0 %v1429
    %1659 = vmatprep.subr.mxu0 %v1432
    %1660 = vmatpush1.msra.mxu0 %v1431
    %1661 = vmatprep.subr.mxu0 %v1434
    %1662 = vmatpush1.msra.mxu0 %v1433
    %1663 = vmatprep.subr.mxu0 %v1436
    %1664 = vmatpush1.msra.mxu0 %v1435
    %1665 = vmatprep.subr.mxu0 %v1438
    %1666 = vmatpush1.msra.mxu0 %v1437
    %1667 = vmatprep.subr.mxu0 %v1440
    %1668 = vmatpush1.msra.mxu0 %v1439
    %1669 = vmatprep.subr.mxu0 %v1442
    %1670 = vmatpush1.msra.mxu0 %v1441
    %1671 = vmatprep.subr.mxu0 %v1444
    %1672 = vmatpush1.msra.mxu0 %v1443
    %1673 = vmatprep.subr.mxu0 0.0
    %1674 = vmatpush1.msra.mxu0 0.0
    %1675 = vmatprep.subr.mxu0 0.0
    %1676 = vmatpush1.msra.mxu0 0.0
    %1677 = vmatprep.subr.mxu0 0.0
    %1678 = vmatpush1.msra.mxu0 0.0
    %1679 = vmatprep.subr.mxu0 0.0
    %1680 = vmatpush1.msra.mxu0 0.0
    %1681 = vmatprep.subr.mxu0 0.0
    %1682 = vmatpush1.msra.mxu0 0.0
    %1683 = vmatprep.subr.mxu0 0.0
    %1684 = vmatpush1.msra.mxu0 0.0
    %1685 = vmatprep.subr.mxu0 0.0
    %1686 = vmatpush1.msra.mxu0 0.0
    %1687 = vmatprep.subr.mxu0 0.0
    %1688 = vmatpush1.msra.mxu0 0.0
    %1689 = vmatprep.subr.mxu0 0.0
    %1690 = vmatpush1.msra.mxu0 0.0
    %1691 = vmatprep.subr.mxu0 0.0
    %1692 = vmatpush1.msra.mxu0 0.0
    %1693 = vmatprep.subr.mxu0 0.0
    %1694 = vmatpush1.msra.mxu0 0.0
    %1695 = vmatprep.subr.mxu0 0.0
    %1696 = vmatpush1.msra.mxu0 0.0
    %1697 = vmatprep.subr.mxu0 0.0
    %1698 = vmatpush1.msra.mxu0 0.0
    %1699 = vmatprep.subr.mxu0 0.0
    %1700 = vmatpush1.msra.mxu0 0.0
    %1701 = vmatprep.subr.mxu0 0.0
    %1702 = vmatpush1.msra.mxu0 0.0
    %1703 = vmatprep.subr.mxu0 0.0
    %1704 = vmatpush1.msra.mxu0 0.0
    %1705 = vmatprep.subr.mxu0 0.0
    %1706 = vmatpush1.msra.mxu0 0.0
    %1707 = vmatprep.subr.mxu0 0.0
    %1708 = vmatpush1.msra.mxu0 0.0
    %1709 = vmatprep.subr.mxu0 0.0
    %1710 = vmatpush1.msra.mxu0 0.0
    %1711 = vmatprep.subr.mxu0 0.0
    %1712 = vmatpush1.msra.mxu0 0.0
    %1713 = vmatprep.subr.mxu0 0.0
    %1714 = vmatpush1.msra.mxu0 0.0
    %1715 = vmatprep.subr.mxu0 0.0
    %1716 = vmatpush1.msra.mxu0 0.0
    %1717 = vmatprep.subr.mxu0 0.0
    %1718 = vmatpush1.msra.mxu0 0.0
    %1719 = vmatprep.subr.mxu0 0.0
    %1720 = vmatpush1.msra.mxu0 0.0
    %1721 = vmatprep.mubr.f32.mxu0 0.0
    %1722 = vmatmul.mubr.f32.gmra.mrb[0].mxu0 %v1655
    %v1723 = vpop.f32.mrb[0].mxu0
    %v1724 = vadd.f32 0.0, %v1723
    %v1725 = vpop.f32.mrb[0].mxu0
    %v1726 = vadd.f32 0.0, %v1725
    %1727 = vdwg.mxu0
    %v1728 = vadd.f32 %v1395, %v1724
    %v1729 = vadd.f32 %v1397, %v1726
    %v1730 = vxor.u32 %v1728, 2147483648
    %v1731 = vxor.u32 %v1729, 2147483648
    %v1732 = vmul.f32 %v1730, 1.442695
    %v1733 = vpow.pop %v1732
    %v1734 = vmul.f32 %v1731, 1.442695
    %v1735 = vpow.pop %v1734
    %v1736 = vadd.f32 %v1733, 1.0
    %v1737 = vadd.f32 %v1735, 1.0
    %v1738 = vrcp.pop %v1736
    %v1739 = vmul.f32 1.0, %v1738
    %v1740 = vrcp.pop %v1737
    %v1741 = vmul.f32 1.0, %v1740
    %v1742 = vtanh.pop %v1729
    %v1743 = vmul.f32 %v1739, %v1647
    %1745 = vrot.lane.b32.xlu0 %v1742, 64
    %v1746 = vpop.permute.xlu0 %1745
    %v1748 = vmul.f32 %v1739, %v1746
    %1750 = vrot.lane.b32.xlu0 %v1748, 64
    %v1751 = vpop.permute.xlu0 %1750
    %v1753 = vadd.f32 %v1743, %v1751
    %v1754 = vtanh.pop %v1753
    %1756 = vrot.lane.b32.xlu0 %v1754, 64
    %v1757 = vpop.permute.xlu0 %1756
    %v1759 = vmul.f32 %v1741, %v1757
    %v1761 = vsel %vm436, %v1759, 0
    %1763 = vmatprep.subr.mxu0 %v1430
    %1764 = vmatpush1.msra.mxu0 %v1429
    %1765 = vmatprep.subr.mxu0 %v1432
    %1766 = vmatpush1.msra.mxu0 %v1431
    %1767 = vmatprep.subr.mxu0 %v1434
    %1768 = vmatpush1.msra.mxu0 %v1433
    %1769 = vmatprep.subr.mxu0 %v1436
    %1770 = vmatpush1.msra.mxu0 %v1435
    %1771 = vmatprep.subr.mxu0 %v1438
    %1772 = vmatpush1.msra.mxu0 %v1437
    %1773 = vmatprep.subr.mxu0 %v1440
    %1774 = vmatpush1.msra.mxu0 %v1439
    %1775 = vmatprep.subr.mxu0 %v1442
    %1776 = vmatpush1.msra.mxu0 %v1441
    %1777 = vmatprep.subr.mxu0 %v1444
    %1778 = vmatpush1.msra.mxu0 %v1443
    %1779 = vmatprep.subr.mxu0 0.0
    %1780 = vmatpush1.msra.mxu0 0.0
    %1781 = vmatprep.subr.mxu0 0.0
    %1782 = vmatpush1.msra.mxu0 0.0
    %1783 = vmatprep.subr.mxu0 0.0
    %1784 = vmatpush1.msra.mxu0 0.0
    %1785 = vmatprep.subr.mxu0 0.0
    %1786 = vmatpush1.msra.mxu0 0.0
    %1787 = vmatprep.subr.mxu0 0.0
    %1788 = vmatpush1.msra.mxu0 0.0
    %1789 = vmatprep.subr.mxu0 0.0
    %1790 = vmatpush1.msra.mxu0 0.0
    %1791 = vmatprep.subr.mxu0 0.0
    %1792 = vmatpush1.msra.mxu0 0.0
    %1793 = vmatprep.subr.mxu0 0.0
    %1794 = vmatpush1.msra.mxu0 0.0
    %1795 = vmatprep.subr.mxu0 0.0
    %1796 = vmatpush1.msra.mxu0 0.0
    %1797 = vmatprep.subr.mxu0 0.0
    %1798 = vmatpush1.msra.mxu0 0.0
    %1799 = vmatprep.subr.mxu0 0.0
    %1800 = vmatpush1.msra.mxu0 0.0
    %1801 = vmatprep.subr.mxu0 0.0
    %1802 = vmatpush1.msra.mxu0 0.0
    %1803 = vmatprep.subr.mxu0 0.0
    %1804 = vmatpush1.msra.mxu0 0.0
    %1805 = vmatprep.subr.mxu0 0.0
    %1806 = vmatpush1.msra.mxu0 0.0
    %1807 = vmatprep.subr.mxu0 0.0
    %1808 = vmatpush1.msra.mxu0 0.0
    %1809 = vmatprep.subr.mxu0 0.0
    %1810 = vmatpush1.msra.mxu0 0.0
    %1811 = vmatprep.subr.mxu0 0.0
    %1812 = vmatpush1.msra.mxu0 0.0
    %1813 = vmatprep.subr.mxu0 0.0
    %1814 = vmatpush1.msra.mxu0 0.0
    %1815 = vmatprep.subr.mxu0 0.0
    %1816 = vmatpush1.msra.mxu0 0.0
    %1817 = vmatprep.subr.mxu0 0.0
    %1818 = vmatpush1.msra.mxu0 0.0
    %1819 = vmatprep.subr.mxu0 0.0
    %1820 = vmatpush1.msra.mxu0 0.0
    %1821 = vmatprep.subr.mxu0 0.0
    %1822 = vmatpush1.msra.mxu0 0.0
    %1823 = vmatprep.subr.mxu0 0.0
    %1824 = vmatpush1.msra.mxu0 0.0
    %1825 = vmatprep.subr.mxu0 0.0
    %1826 = vmatpush1.msra.mxu0 0.0
    %1827 = vmatprep.mubr.f32.mxu0 0.0
    %1828 = vmatmul.mubr.f32.gmra.mrb[0].mxu0 %v1761
    %v1829 = vpop.f32.mrb[0].mxu0
    %v1830 = vadd.f32 0.0, %v1829
    %v1831 = vpop.f32.mrb[0].mxu0
    %v1832 = vadd.f32 0.0, %v1831
    %1833 = vdwg.mxu0
    %v1834 = vadd.f32 %v1401, %v1830
    %v1835 = vadd.f32 %v1403, %v1832
    %v1836 = vxor.u32 %v1834, 2147483648
    %v1837 = vxor.u32 %v1835, 2147483648
    %v1838 = vmul.f32 %v1836, 1.442695
    %v1839 = vpow.pop %v1838
    %v1840 = vmul.f32 %v1837, 1.442695
    %v1841 = vpow.pop %v1840
    %v1842 = vadd.f32 %v1839, 1.0
    %v1843 = vadd.f32 %v1841, 1.0
    %v1844 = vrcp.pop %v1842
    %v1845 = vmul.f32 1.0, %v1844
    %v1846 = vrcp.pop %v1843
    %v1847 = vmul.f32 1.0, %v1846
    %v1848 = vtanh.pop %v1835
    %v1849 = vmul.f32 %v1845, %v1753
    %1851 = vrot.lane.b32.xlu0 %v1848, 64
    %v1852 = vpop.permute.xlu0 %1851
    %v1854 = vmul.f32 %v1845, %v1852
    %1856 = vrot.lane.b32.xlu0 %v1854, 64
    %v1857 = vpop.permute.xlu0 %1856
    %v1859 = vadd.f32 %v1849, %v1857
    %v1860 = vtanh.pop %v1859
    %1862 = vrot.lane.b32.xlu0 %v1860, 64
    %v1863 = vpop.permute.xlu0 %1862
    %v1865 = vmul.f32 %v1847, %v1863
    %v1867 = vsel %vm436, %v1865, 0
    %1869 = vmatprep.subr.mxu0 %v1430
    %1870 = vmatpush1.msra.mxu0 %v1429
    %1871 = vmatprep.subr.mxu0 %v1432
    %1872 = vmatpush1.msra.mxu0 %v1431
    %1873 = vmatprep.subr.mxu0 %v1434
    %1874 = vmatpush1.msra.mxu0 %v1433
    %1875 = vmatprep.subr.mxu0 %v1436
    %1876 = vmatpush1.msra.mxu0 %v1435
    %1877 = vmatprep.subr.mxu0 %v1438
    %1878 = vmatpush1.msra.mxu0 %v1437
    %1879 = vmatprep.subr.mxu0 %v1440
    %1880 = vmatpush1.msra.mxu0 %v1439
    %1881 = vmatprep.subr.mxu0 %v1442
    %1882 = vmatpush1.msra.mxu0 %v1441
    %1883 = vmatprep.subr.mxu0 %v1444
    %1884 = vmatpush1.msra.mxu0 %v1443
    %1885 = vmatprep.subr.mxu0 0.0
    %1886 = vmatpush1.msra.mxu0 0.0
    %1887 = vmatprep.subr.mxu0 0.0
    %1888 = vmatpush1.msra.mxu0 0.0
    %1889 = vmatprep.subr.mxu0 0.0
    %1890 = vmatpush1.msra.mxu0 0.0
    %1891 = vmatprep.subr.mxu0 0.0
    %1892 = vmatpush1.msra.mxu0 0.0
    %1893 = vmatprep.subr.mxu0 0.0
    %1894 = vmatpush1.msra.mxu0 0.0
    %1895 = vmatprep.subr.mxu0 0.0
    %1896 = vmatpush1.msra.mxu0 0.0
    %1897 = vmatprep.subr.mxu0 0.0
    %1898 = vmatpush1.msra.mxu0 0.0
    %1899 = vmatprep.subr.mxu0 0.0
    %1900 = vmatpush1.msra.mxu0 0.0
    %1901 = vmatprep.subr.mxu0 0.0
    %1902 = vmatpush1.msra.mxu0 0.0
    %1903 = vmatprep.subr.mxu0 0.0
    %1904 = vmatpush1.msra.mxu0 0.0
    %1905 = vmatprep.subr.mxu0 0.0
    %1906 = vmatpush1.msra.mxu0 0.0
    %1907 = vmatprep.subr.mxu0 0.0
    %1908 = vmatpush1.msra.mxu0 0.0
    %1909 = vmatprep.subr.mxu0 0.0
    %1910 = vmatpush1.msra.mxu0 0.0
    %1911 = vmatprep.subr.mxu0 0.0
    %1912 = vmatpush1.msra.mxu0 0.0
    %1913 = vmatprep.subr.mxu0 0.0
    %1914 = vmatpush1.msra.mxu0 0.0
    %1915 = vmatprep.subr.mxu0 0.0
    %1916 = vmatpush1.msra.mxu0 0.0
    %1917 = vmatprep.subr.mxu0 0.0
    %1918 = vmatpush1.msra.mxu0 0.0
    %1919 = vmatprep.subr.mxu0 0.0
    %1920 = vmatpush1.msra.mxu0 0.0
    %1921 = vmatprep.subr.mxu0 0.0
    %1922 = vmatpush1.msra.mxu0 0.0
    %1923 = vmatprep.subr.mxu0 0.0
    %1924 = vmatpush1.msra.mxu0 0.0
    %1925 = vmatprep.subr.mxu0 0.0
    %1926 = vmatpush1.msra.mxu0 0.0
    %1927 = vmatprep.subr.mxu0 0.0
    %1928 = vmatpush1.msra.mxu0 0.0
    %1929 = vmatprep.subr.mxu0 0.0
    %1930 = vmatpush1.msra.mxu0 0.0
    %1931 = vmatprep.subr.mxu0 0.0
    %1932 = vmatpush1.msra.mxu0 0.0
    %1933 = vmatprep.mubr.f32.mxu0 0.0
    %1934 = vmatmul.mubr.f32.gmra.mrb[0].mxu0 %v1867
    %v1935 = vpop.f32.mrb[0].mxu0
    %v1936 = vadd.f32 0.0, %v1935
    %v1937 = vpop.f32.mrb[0].mxu0
    %v1938 = vadd.f32 0.0, %v1937
    %1939 = vdwg.mxu0
    %v1940 = vadd.f32 %v1407, %v1936
    %v1941 = vadd.f32 %v1409, %v1938
    %v1942 = vxor.u32 %v1940, 2147483648
    %v1943 = vxor.u32 %v1941, 2147483648
    %v1944 = vmul.f32 %v1942, 1.442695
    %v1945 = vpow.pop %v1944
    %v1946 = vmul.f32 %v1943, 1.442695
    %v1947 = vpow.pop %v1946
    %v1948 = vadd.f32 %v1945, 1.0
    %v1949 = vadd.f32 %v1947, 1.0
    %v1950 = vrcp.pop %v1948
    %v1951 = vmul.f32 1.0, %v1950
    %v1952 = vrcp.pop %v1949
    %v1953 = vmul.f32 1.0, %v1952
    %v1954 = vtanh.pop %v1941
    %v1955 = vmul.f32 %v1951, %v1859
    %1957 = vrot.lane.b32.xlu0 %v1954, 64
    %v1958 = vpop.permute.xlu0 %1957
    %v1960 = vmul.f32 %v1951, %v1958
    %1962 = vrot.lane.b32.xlu0 %v1960, 64
    %v1963 = vpop.permute.xlu0 %1962
    %v1965 = vadd.f32 %v1955, %v1963
    %v1966 = vtanh.pop %v1965
    %1968 = vrot.lane.b32.xlu0 %v1966, 64
    %v1969 = vpop.permute.xlu0 %1968
    %v1971 = vmul.f32 %v1953, %v1969
    %v1973 = vsel %vm436, %v1971, 0
    %1975 = vmatprep.subr.mxu0 %v1430
    %1976 = vmatpush1.msra.mxu0 %v1429
    %1977 = vmatprep.subr.mxu0 %v1432
    %1978 = vmatpush1.msra.mxu0 %v1431
    %1979 = vmatprep.subr.mxu0 %v1434
    %1980 = vmatpush1.msra.mxu0 %v1433
    %1981 = vmatprep.subr.mxu0 %v1436
    %1982 = vmatpush1.msra.mxu0 %v1435
    %1983 = vmatprep.subr.mxu0 %v1438
    %1984 = vmatpush1.msra.mxu0 %v1437
    %1985 = vmatprep.subr.mxu0 %v1440
    %1986 = vmatpush1.msra.mxu0 %v1439
    %1987 = vmatprep.subr.mxu0 %v1442
    %1988 = vmatpush1.msra.mxu0 %v1441
    %1989 = vmatprep.subr.mxu0 %v1444
    %1990 = vmatpush1.msra.mxu0 %v1443
    %1991 = vmatprep.subr.mxu0 0.0
    %1992 = vmatpush1.msra.mxu0 0.0
    %1993 = vmatprep.subr.mxu0 0.0
    %1994 = vmatpush1.msra.mxu0 0.0
    %1995 = vmatprep.subr.mxu0 0.0
    %1996 = vmatpush1.msra.mxu0 0.0
    %1997 = vmatprep.subr.mxu0 0.0
    %1998 = vmatpush1.msra.mxu0 0.0
    %1999 = vmatprep.subr.mxu0 0.0
    %2000 = vmatpush1.msra.mxu0 0.0
    %2001 = vmatprep.subr.mxu0 0.0
    %2002 = vmatpush1.msra.mxu0 0.0
    %2003 = vmatprep.subr.mxu0 0.0
    %2004 = vmatpush1.msra.mxu0 0.0
    %2005 = vmatprep.subr.mxu0 0.0
    %2006 = vmatpush1.msra.mxu0 0.0
    %2007 = vmatprep.subr.mxu0 0.0
    %2008 = vmatpush1.msra.mxu0 0.0
    %2009 = vmatprep.subr.mxu0 0.0
    %2010 = vmatpush1.msra.mxu0 0.0
    %2011 = vmatprep.subr.mxu0 0.0
    %2012 = vmatpush1.msra.mxu0 0.0
    %2013 = vmatprep.subr.mxu0 0.0
    %2014 = vmatpush1.msra.mxu0 0.0
    %2015 = vmatprep.subr.mxu0 0.0
    %2016 = vmatpush1.msra.mxu0 0.0
    %2017 = vmatprep.subr.mxu0 0.0
    %2018 = vmatpush1.msra.mxu0 0.0
    %2019 = vmatprep.subr.mxu0 0.0
    %2020 = vmatpush1.msra.mxu0 0.0
    %2021 = vmatprep.subr.mxu0 0.0
    %2022 = vmatpush1.msra.mxu0 0.0
    %2023 = vmatprep.subr.mxu0 0.0
    %2024 = vmatpush1.msra.mxu0 0.0
    %2025 = vmatprep.subr.mxu0 0.0
    %2026 = vmatpush1.msra.mxu0 0.0
    %2027 = vmatprep.subr.mxu0 0.0
    %2028 = vmatpush1.msra.mxu0 0.0
    %2029 = vmatprep.subr.mxu0 0.0
    %2030 = vmatpush1.msra.mxu0 0.0
    %2031 = vmatprep.subr.mxu0 0.0
    %2032 = vmatpush1.msra.mxu0 0.0
    %2033 = vmatprep.subr.mxu0 0.0
    %2034 = vmatpush1.msra.mxu0 0.0
    %2035 = vmatprep.subr.mxu0 0.0
    %2036 = vmatpush1.msra.mxu0 0.0
    %2037 = vmatprep.subr.mxu0 0.0
    %2038 = vmatpush1.msra.mxu0 0.0
    %2039 = vmatprep.mubr.f32.mxu0 0.0
    %2040 = vmatmul.mubr.f32.gmra.mrb[0].mxu0 %v1973
    %v2041 = vpop.f32.mrb[0].mxu0
    %v2042 = vadd.f32 0.0, %v2041
    %v2043 = vpop.f32.mrb[0].mxu0
    %v2044 = vadd.f32 0.0, %v2043
    %2045 = vdwg.mxu0
    %v2046 = vadd.f32 %v1413, %v2042
    %v2047 = vadd.f32 %v1415, %v2044
    %v2048 = vxor.u32 %v2046, 2147483648
    %v2049 = vxor.u32 %v2047, 2147483648
    %v2050 = vmul.f32 %v2048, 1.442695
    %v2051 = vpow.pop %v2050
    %v2052 = vmul.f32 %v2049, 1.442695
    %v2053 = vpow.pop %v2052
    %v2054 = vadd.f32 %v2051, 1.0
    %v2055 = vadd.f32 %v2053, 1.0
    %v2056 = vrcp.pop %v2054
    %v2057 = vmul.f32 1.0, %v2056
    %v2058 = vrcp.pop %v2055
    %v2059 = vmul.f32 1.0, %v2058
    %v2060 = vtanh.pop %v2047
    %v2061 = vmul.f32 %v2057, %v1965
    %2063 = vrot.lane.b32.xlu0 %v2060, 64
    %v2064 = vpop.permute.xlu0 %2063
    %v2066 = vmul.f32 %v2057, %v2064
    %2068 = vrot.lane.b32.xlu0 %v2066, 64
    %v2069 = vpop.permute.xlu0 %2068
    %v2071 = vadd.f32 %v2061, %v2069
    %v2072 = vtanh.pop %v2071
    %2074 = vrot.lane.b32.xlu0 %v2072, 64
    %v2075 = vpop.permute.xlu0 %2074
    %v2077 = vmul.f32 %v2059, %v2075
    %v2079 = vsel %vm436, %v2077, 0
    %2081 = vmatprep.subr.mxu0 %v1430
    %2082 = vmatpush1.msra.mxu0 %v1429
    %2083 = vmatprep.subr.mxu0 %v1432
    %2084 = vmatpush1.msra.mxu0 %v1431
    %2085 = vmatprep.subr.mxu0 %v1434
    %2086 = vmatpush1.msra.mxu0 %v1433
    %2087 = vmatprep.subr.mxu0 %v1436
    %2088 = vmatpush1.msra.mxu0 %v1435
    %2089 = vmatprep.subr.mxu0 %v1438
    %2090 = vmatpush1.msra.mxu0 %v1437
    %2091 = vmatprep.subr.mxu0 %v1440
    %2092 = vmatpush1.msra.mxu0 %v1439
    %2093 = vmatprep.subr.mxu0 %v1442
    %2094 = vmatpush1.msra.mxu0 %v1441
    %2095 = vmatprep.subr.mxu0 %v1444
    %2096 = vmatpush1.msra.mxu0 %v1443
    %2097 = vmatprep.subr.mxu0 0.0
    %2098 = vmatpush1.msra.mxu0 0.0
    %2099 = vmatprep.subr.mxu0 0.0
    %2100 = vmatpush1.msra.mxu0 0.0
    %2101 = vmatprep.subr.mxu0 0.0
    %2102 = vmatpush1.msra.mxu0 0.0
    %2103 = vmatprep.subr.mxu0 0.0
    %2104 = vmatpush1.msra.mxu0 0.0
    %2105 = vmatprep.subr.mxu0 0.0
    %2106 = vmatpush1.msra.mxu0 0.0
    %2107 = vmatprep.subr.mxu0 0.0
    %2108 = vmatpush1.msra.mxu0 0.0
    %2109 = vmatprep.subr.mxu0 0.0
    %2110 = vmatpush1.msra.mxu0 0.0
    %2111 = vmatprep.subr.mxu0 0.0
    %2112 = vmatpush1.msra.mxu0 0.0
    %2113 = vmatprep.subr.mxu0 0.0
    %2114 = vmatpush1.msra.mxu0 0.0
    %2115 = vmatprep.subr.mxu0 0.0
    %2116 = vmatpush1.msra.mxu0 0.0
    %2117 = vmatprep.subr.mxu0 0.0
    %2118 = vmatpush1.msra.mxu0 0.0
    %2119 = vmatprep.subr.mxu0 0.0
    %2120 = vmatpush1.msra.mxu0 0.0
    %2121 = vmatprep.subr.mxu0 0.0
    %2122 = vmatpush1.msra.mxu0 0.0
    %2123 = vmatprep.subr.mxu0 0.0
    %2124 = vmatpush1.msra.mxu0 0.0
    %2125 = vmatprep.subr.mxu0 0.0
    %2126 = vmatpush1.msra.mxu0 0.0
    %2127 = vmatprep.subr.mxu0 0.0
    %2128 = vmatpush1.msra.mxu0 0.0
    %2129 = vmatprep.subr.mxu0 0.0
    %2130 = vmatpush1.msra.mxu0 0.0
    %2131 = vmatprep.subr.mxu0 0.0
    %2132 = vmatpush1.msra.mxu0 0.0
    %2133 = vmatprep.subr.mxu0 0.0
    %2134 = vmatpush1.msra.mxu0 0.0
    %2135 = vmatprep.subr.mxu0 0.0
    %2136 = vmatpush1.msra.mxu0 0.0
    %2137 = vmatprep.subr.mxu0 0.0
    %2138 = vmatpush1.msra.mxu0 0.0
    %2139 = vmatprep.subr.mxu0 0.0
    %2140 = vmatpush1.msra.mxu0 0.0
    %2141 = vmatprep.subr.mxu0 0.0
    %2142 = vmatpush1.msra.mxu0 0.0
    %2143 = vmatprep.subr.mxu0 0.0
    %2144 = vmatpush1.msra.mxu0 0.0
    %2145 = vmatprep.mubr.f32.mxu0 0.0
    %2146 = vmatmul.mubr.f32.gmra.mrb[0].mxu0 %v2079
    %v2147 = vpop.f32.mrb[0].mxu0
    %v2148 = vadd.f32 0.0, %v2147
    %v2149 = vpop.f32.mrb[0].mxu0
    %v2150 = vadd.f32 0.0, %v2149
    %2151 = vdwg.mxu0
    %v2152 = vadd.f32 %v1419, %v2148
    %v2153 = vadd.f32 %v1421, %v2150
    %v2154 = vxor.u32 %v2152, 2147483648
    %v2155 = vxor.u32 %v2153, 2147483648
    %v2156 = vmul.f32 %v2154, 1.442695
    %v2157 = vpow.pop %v2156
    %v2158 = vmul.f32 %v2155, 1.442695
    %v2159 = vpow.pop %v2158
    %v2160 = vadd.f32 %v2157, 1.0
    %v2161 = vadd.f32 %v2159, 1.0
    %v2162 = vrcp.pop %v2160
    %v2163 = vmul.f32 1.0, %v2162
    %v2164 = vrcp.pop %v2161
    %v2165 = vmul.f32 1.0, %v2164
    %v2166 = vtanh.pop %v2153
    %v2167 = vmul.f32 %v2163, %v2071
    %2169 = vrot.lane.b32.xlu0 %v2166, 64
    %v2170 = vpop.permute.xlu0 %2169
    %v2172 = vmul.f32 %v2163, %v2170
    %2174 = vrot.lane.b32.xlu0 %v2172, 64
    %v2175 = vpop.permute.xlu0 %2174
    %v2177 = vadd.f32 %v2167, %v2175
    %v2178 = vtanh.pop %v2177
    %2180 = vrot.lane.b32.xlu0 %v2178, 64
    %v2181 = vpop.permute.xlu0 %2180
    %v2183 = vmul.f32 %v2165, %v2181
    %v2185 = vsel %vm436, %v2183, 0
    %2187 = vmatprep.subr.mxu0 %v1430
    %2188 = vmatpush1.msra.mxu0 %v1429
    %2189 = vmatprep.subr.mxu0 %v1432
    %2190 = vmatpush1.msra.mxu0 %v1431
    %2191 = vmatprep.subr.mxu0 %v1434
    %2192 = vmatpush1.msra.mxu0 %v1433
    %2193 = vmatprep.subr.mxu0 %v1436
    %2194 = vmatpush1.msra.mxu0 %v1435
    %2195 = vmatprep.subr.mxu0 %v1438
    %2196 = vmatpush1.msra.mxu0 %v1437
    %2197 = vmatprep.subr.mxu0 %v1440
    %2198 = vmatpush1.msra.mxu0 %v1439
    %2199 = vmatprep.subr.mxu0 %v1442
    %2200 = vmatpush1.msra.mxu0 %v1441
    %2201 = vmatprep.subr.mxu0 %v1444
    %2202 = vmatpush1.msra.mxu0 %v1443
    %2203 = vmatprep.subr.mxu0 0.0
    %2204 = vmatpush1.msra.mxu0 0.0
    %2205 = vmatprep.subr.mxu0 0.0
    %2206 = vmatpush1.msra.mxu0 0.0
    %2207 = vmatprep.subr.mxu0 0.0
    %2208 = vmatpush1.msra.mxu0 0.0
    %2209 = vmatprep.subr.mxu0 0.0
    %2210 = vmatpush1.msra.mxu0 0.0
    %2211 = vmatprep.subr.mxu0 0.0
    %2212 = vmatpush1.msra.mxu0 0.0
    %2213 = vmatprep.subr.mxu0 0.0
    %2214 = vmatpush1.msra.mxu0 0.0
    %2215 = vmatprep.subr.mxu0 0.0
    %2216 = vmatpush1.msra.mxu0 0.0
    %2217 = vmatprep.subr.mxu0 0.0
    %2218 = vmatpush1.msra.mxu0 0.0
    %2219 = vmatprep.subr.mxu0 0.0
    %2220 = vmatpush1.msra.mxu0 0.0
    %2221 = vmatprep.subr.mxu0 0.0
    %2222 = vmatpush1.msra.mxu0 0.0
    %2223 = vmatprep.subr.mxu0 0.0
    %2224 = vmatpush1.msra.mxu0 0.0
    %2225 = vmatprep.subr.mxu0 0.0
    %2226 = vmatpush1.msra.mxu0 0.0
    %2227 = vmatprep.subr.mxu0 0.0
    %2228 = vmatpush1.msra.mxu0 0.0
    %2229 = vmatprep.subr.mxu0 0.0
    %2230 = vmatpush1.msra.mxu0 0.0
    %2231 = vmatprep.subr.mxu0 0.0
    %2232 = vmatpush1.msra.mxu0 0.0
    %2233 = vmatprep.subr.mxu0 0.0
    %2234 = vmatpush1.msra.mxu0 0.0
    %2235 = vmatprep.subr.mxu0 0.0
    %2236 = vmatpush1.msra.mxu0 0.0
    %2237 = vmatprep.subr.mxu0 0.0
    %2238 = vmatpush1.msra.mxu0 0.0
    %2239 = vmatprep.subr.mxu0 0.0
    %2240 = vmatpush1.msra.mxu0 0.0
    %2241 = vmatprep.subr.mxu0 0.0
    %2242 = vmatpush1.msra.mxu0 0.0
    %2243 = vmatprep.subr.mxu0 0.0
    %2244 = vmatpush1.msra.mxu0 0.0
    %2245 = vmatprep.subr.mxu0 0.0
    %2246 = vmatpush1.msra.mxu0 0.0
    %2247 = vmatprep.subr.mxu0 0.0
    %2248 = vmatpush1.msra.mxu0 0.0
    %2249 = vmatprep.subr.mxu0 0.0
    %2250 = vmatpush1.msra.mxu0 0.0
    %2251 = vmatprep.mubr.f32.mxu0 0.0
    %2252 = vmatmul.mubr.f32.gmra.mrb[0].mxu0 %v2185
    %v2253 = vpop.f32.mrb[0].mxu0
    %v2254 = vadd.f32 0.0, %v2253
    %v2255 = vpop.f32.mrb[0].mxu0
    %v2256 = vadd.f32 0.0, %v2255
    %2257 = vdwg.mxu0
    %v2258 = vadd.f32 %v1425, %v2254
    %v2259 = vadd.f32 %v1427, %v2256
    %v2260 = vxor.u32 %v2258, 2147483648
    %v2261 = vxor.u32 %v2259, 2147483648
    %v2262 = vmul.f32 %v2260, 1.442695
    %v2263 = vpow.pop %v2262
    %v2264 = vmul.f32 %v2261, 1.442695
    %v2265 = vpow.pop %v2264
    %v2266 = vadd.f32 %v2263, 1.0
    %v2267 = vadd.f32 %v2265, 1.0
    %v2268 = vrcp.pop %v2266
    %v2269 = vmul.f32 1.0, %v2268
    %v2270 = vrcp.pop %v2267
    %v2271 = vmul.f32 1.0, %v2270
    %v2272 = vtanh.pop %v2259
    %v2273 = vmul.f32 %v2269, %v2177
    %2275 = vrot.lane.b32.xlu0 %v2272, 64
    %v2276 = vpop.permute.xlu0 %2275
    %v2278 = vmul.f32 %v2269, %v2276
    %2280 = vrot.lane.b32.xlu0 %v2278, 64
    %v2281 = vpop.permute.xlu0 %2280
    %v2283 = vadd.f32 %v2273, %v2281
    %v2284 = vtanh.pop %v2283
    %2286 = vrot.lane.b32.xlu0 %v2284, 64
    %v2287 = vpop.permute.xlu0 %2286
    %v2289 = vmul.f32 %v2271, %v2287
    %v2290 = vld [vmem:[%s9] sm:$0xff]
    %v2291 = vld [vmem:[%s9 + $0x8] sm:$0xff]
    %v2292 = vld [vmem:[%s9 + $0x10] sm:$0xff]
    %v2293 = vld [vmem:[%s9 + $0x18] sm:$0xff]
    %v2294 = vld [vmem:[%s9 + $0x20] sm:$0xff]
    %v2295 = vld [vmem:[%s9 + $0x28] sm:$0xff]
    %v2296 = vld [vmem:[%s9 + $0x30] sm:$0xff]
    %v2297 = vld [vmem:[%s9 + $0x38] sm:$0xff]
    %v2298 = vld [vmem:[#allocation2] sm:$0x1]
    %v2300 = vlaneseq
    %v2301 = vshrl.u32 %v2300, 7
    %v2302 = vsub.s32 0, %v2301
    %v2303 = vrot.slane %v2298, %v2302
    %v2306 = vsel %vm436, %v2289, 0
    %2308 = vmatprep.subr.mxu0 0.0
    %2309 = vmatpush1.msra.mxu0 %v2290
    %2310 = vmatprep.subr.mxu0 0.0
    %2311 = vmatpush1.msra.mxu0 %v2291
    %2312 = vmatprep.subr.mxu0 0.0
    %2313 = vmatpush1.msra.mxu0 %v2292
    %2314 = vmatprep.subr.mxu0 0.0
    %2315 = vmatpush1.msra.mxu0 %v2293
    %2316 = vmatprep.subr.mxu0 0.0
    %2317 = vmatpush1.msra.mxu0 %v2294
    %2318 = vmatprep.subr.mxu0 0.0
    %2319 = vmatpush1.msra.mxu0 %v2295
    %2320 = vmatprep.subr.mxu0 0.0
    %2321 = vmatpush1.msra.mxu0 %v2296
    %2322 = vmatprep.subr.mxu0 0.0
    %2323 = vmatpush1.msra.mxu0 %v2297
    %2324 = vmatprep.subr.mxu0 0.0
    %2325 = vmatpush1.msra.mxu0 0.0
    %2326 = vmatprep.subr.mxu0 0.0
    %2327 = vmatpush1.msra.mxu0 0.0
    %2328 = vmatprep.subr.mxu0 0.0
    %2329 = vmatpush1.msra.mxu0 0.0
    %2330 = vmatprep.subr.mxu0 0.0
    %2331 = vmatpush1.msra.mxu0 0.0
    %2332 = vmatprep.subr.mxu0 0.0
    %2333 = vmatpush1.msra.mxu0 0.0
    %2334 = vmatprep.subr.mxu0 0.0
    %2335 = vmatpush1.msra.mxu0 0.0
    %2336 = vmatprep.subr.mxu0 0.0
    %2337 = vmatpush1.msra.mxu0 0.0
    %2338 = vmatprep.subr.mxu0 0.0
    %2339 = vmatpush1.msra.mxu0 0.0
    %2340 = vmatprep.subr.mxu0 0.0
    %2341 = vmatpush1.msra.mxu0 0.0
    %2342 = vmatprep.subr.mxu0 0.0
    %2343 = vmatpush1.msra.mxu0 0.0
    %2344 = vmatprep.subr.mxu0 0.0
    %2345 = vmatpush1.msra.mxu0 0.0
    %2346 = vmatprep.subr.mxu0 0.0
    %2347 = vmatpush1.msra.mxu0 0.0
    %2348 = vmatprep.subr.mxu0 0.0
    %2349 = vmatpush1.msra.mxu0 0.0
    %2350 = vmatprep.subr.mxu0 0.0
    %2351 = vmatpush1.msra.mxu0 0.0
    %2352 = vmatprep.subr.mxu0 0.0
    %2353 = vmatpush1.msra.mxu0 0.0
    %2354 = vmatprep.subr.mxu0 0.0
    %2355 = vmatpush1.msra.mxu0 0.0
    %2356 = vmatprep.subr.mxu0 0.0
    %2357 = vmatpush1.msra.mxu0 0.0
    %2358 = vmatprep.subr.mxu0 0.0
    %2359 = vmatpush1.msra.mxu0 0.0
    %2360 = vmatprep.subr.mxu0 0.0
    %2361 = vmatpush1.msra.mxu0 0.0
    %2362 = vmatprep.subr.mxu0 0.0
    %2363 = vmatpush1.msra.mxu0 0.0
    %2364 = vmatprep.subr.mxu0 0.0
    %2365 = vmatpush1.msra.mxu0 0.0
    %2366 = vmatprep.subr.mxu0 0.0
    %2367 = vmatpush1.msra.mxu0 0.0
    %2368 = vmatprep.subr.mxu0 0.0
    %2369 = vmatpush1.msra.mxu0 0.0
    %2370 = vmatprep.subr.mxu0 0.0
    %2371 = vmatpush1.msra.mxu0 0.0
    %2372 = vmatprep.mubr.f32.mxu0 0.0
    %2373 = vmatmul.mubr.f32.gmra.mrb[0].mxu0 %v2306
    %v2374 = vpop.f32.mrb[0].mxu0
    %v2375 = vadd.f32 %v2303, %v2374
    %v2376 = vpop.f32.mrb[0].mxu0
    %2377 = vdwg.mxu0
    %v2378 = vxor.u32 %v2375, 2147483648
    %v2379 = vmul.f32 %v2378, 1.442695
    %v2380 = vpow.pop %v2379
    %v2381 = vadd.f32 %v2380, 1.0
    %v2382 = vrcp.pop %v2381
    %v2383 = vmul.f32 1.0, %v2382
    %vm2384 = vcmask 7168
    %2385 = vst.msk [vmem:[%s11] sm:$0xff] %vm2384, %v2383
    // Predicated region
    $region58: #{tpu_custom_call.1} parent=1 // pred_check
      _
    $region59: #{tpu_custom_call.1} parent=1 // pred_check_branch
      %2387 = sbr.rel (0) target = $region61
    $region60: #{tpu_custom_call.1} parent=1 // pred_region
      _
    $region61: #{tpu_custom_call.1} parent=1 // pred_fallthru
      _
    // Predicated region
    $region62: #{tpu_custom_call.1} parent=1 // pred_check
      _
    $region63: #{tpu_custom_call.1} parent=1 // pred_check_branch
      %2389 = sbr.rel (0) target = $region65
    $region64: #{tpu_custom_call.1} parent=1 // pred_region
      _
    $region65: #{tpu_custom_call.1} parent=1 // pred_fallthru
      _
    %2390 = vsyncpa [#allocation4], 1
    %2391 = vsyncpa [#allocation6], 1

</llo_original>
